<compile_context>
chip_gen: v5e
topology: v5e:2x2
jax: 0.10.0
libtpu: 0.0.40
codegen_flags: <defaults>
</compile_context>

<pallas_src>
import functools

import jax
import jax.numpy as jnp
from jax.experimental import pallas as pl
from jax.experimental.pallas import tpu as pltpu

LANE = 128


def _round_up8(v):
    return ((int(v) + 7) // 8) * 8


def _rbf_kernel(x_ref, e_ref, c_ref, o_ref, *, inv_denominator):
    # x_ref: (Tr, 128)       f32 block of flattened x
    # e_ref: (384, 128*G)    bf16 stacked one-hot lane-replication matrix (resident)
    # c_ref: (1, 128*G)      f32 per-lane grid centers, pre-scaled by 1/denominator
    # o_ref: (Tr, 128*G)     output block in trailing-grid memory layout
    xs = x_ref[...] * inv_denominator                       # (Tr, 128) f32
    # Clamp so +/-inf inputs reconstruct to a huge finite value -> exp underflows
    # to 0, matching exp(-inf^2)=0 of the reference (NaN still propagates).
    xs = jnp.clip(xs, -1e6, 1e6)

    # Exact bf16x3 split of xs; one fused K=384 MXU dot reproduces xs per output
    # lane to ~1 ulp of f32 (each output column has exactly 3 nonzero E3 rows,
    # accumulated in f32 inside the MXU).
    hi = xs.astype(jnp.bfloat16)
    r1 = xs - hi.astype(jnp.float32)
    mid = r1.astype(jnp.bfloat16)
    lo = (r1 - mid.astype(jnp.float32)).astype(jnp.bfloat16)
    lhs = jnp.concatenate([hi, mid, lo], axis=1)             # (Tr, 384) bf16

    xr = jnp.dot(lhs, e_ref[...], preferred_element_type=jnp.float32)  # (Tr, 128*G)

    z = xr - c_ref[...]                                       # broadcast over sublanes
    o_ref[...] = jnp.exp(-(z * z)).astype(o_ref.dtype)


def radial_basis_function(x, *, grid_min=-1.5, grid_max=1.5, num_grids=8,
                          denominator=None, row_tile=512, out_dtype=None,
                          min_pallas_elements=1 << 16):
    """Pallas TPU implementation of RadialBasisFunction.forward.

    Returns an array of shape x.shape + (num_grids,).
    `out_dtype` defaults to float32 (matching the PyTorch module); pass
    jnp.bfloat16 as the fast path to halve output HBM writeback when the
    consumer tolerates it.
    """
    # Match PyTorch's `denominator or default` (0.0/None both fall back).
    denominator = denominator or (grid_max - grid_min) / (num_grids - 1)
    denominator = float(denominator)
    inv_den = 1.0 / denominator
    if out_dtype is None:
        out_dtype = jnp.float32

    x = x.astype(jnp.float32)
    orig_shape = x.shape
    n = x.size
    grid_vals = jnp.linspace(grid_min, grid_max, num_grids, dtype=jnp.float32)

    rows = pl.cdiv(max(n, 1), LANE)

    # Fast path: tiny inputs where pallas_call launch / padding overhead dominates.
    if n < min_pallas_elements or rows < 8:
        return jnp.exp(-(((x[..., None] - grid_vals) * inv_den) ** 2)).astype(out_dtype)

    # Flatten + (only if needed) pad x to a lane-dense (rows, 128) slab.
    pad = rows * LANE - n
    x_flat = x.reshape(-1)
    if pad:
        x_flat = jnp.pad(x_flat, (0, pad))
    x2d = x_flat.reshape(rows, LANE)

    width = LANE * num_grids

    # Balanced block sizing: an even number of roughly equal grid steps so a
    # megacore (v7x, 2 TCs) splits the work evenly; each block >= ~256 rows
    # when possible, capped at row_tile (~2 MiB f32 output block, ~85% of the
    # HBM roofline per measured tiled-elementwise data).
    row_tile = max(8, (int(row_tile) // 8) * 8)
    k = max(1, rows // (2 * 256))
    block_rows = min(row_tile, _round_up8(pl.cdiv(rows, 2 * k)))
    block_rows = max(8, min(block_rows, _round_up8(rows)))
    grid_steps = pl.cdiv(rows, block_rows)          # partial last block is OK

    # Stacked one-hot lane-replication matrix: E3[p*128 + l, l*G + g] = 1 for
    # p in {0,1,2} (hi/mid/lo components), exact in bf16.
    expand = jnp.repeat(jnp.eye(LANE, dtype=jnp.bfloat16), num_grids, axis=1)
    e3 = jnp.concatenate([expand, expand, expand], axis=0)    # (384, 128*G)
    # Per-output-lane grid centers, pre-scaled: c[j] = grid[j % G] / denominator.
    centers = (jnp.tile(grid_vals, LANE) * jnp.float32(inv_den)).reshape(1, width)

    kernel = functools.partial(_rbf_kernel, inv_denominator=inv_den)

    out_itemsize = jnp.dtype(out_dtype).itemsize
    cost = pl.CostEstimate(
        flops=2 * rows * (3 * LANE) * width,                 # replication matmul
        transcendentals=rows * width,                        # one exp per output elem
        bytes_accessed=(rows * LANE * 4                      # x read
                        + rows * width * out_itemsize        # output write
                        + (3 * LANE) * width * 2             # E3 (bf16)
                        + width * 4),                        # centers
    )

    def _build(use_buffered):
        if use_buffered:
            e_spec = pl.BlockSpec((3 * LANE, width), lambda i: (0, 0),
                                  pipeline_mode=pl.Buffered(1))
            c_spec = pl.BlockSpec((1, width), lambda i: (0, 0),
                                  pipeline_mode=pl.Buffered(1))
        else:
            e_spec = pl.BlockSpec((3 * LANE, width), lambda i: (0, 0))
            c_spec = pl.BlockSpec((1, width), lambda i: (0, 0))
        return pl.pallas_call(
            kernel,
            out_shape=jax.ShapeDtypeStruct((rows, width), out_dtype),
            grid_spec=pltpu.PrefetchScalarGridSpec(
                num_scalar_prefetch=0,
                grid=(grid_steps,),
                in_specs=[
                    pl.BlockSpec((block_rows, LANE), lambda i: (i, 0)),
                    e_spec,      # resident, constant index -> DMA'd once
                    c_spec,      # resident, constant index -> DMA'd once
                ],
                out_specs=pl.BlockSpec((block_rows, width), lambda i: (i, 0)),
            ),
            compiler_params=pltpu.CompilerParams(
                dimension_semantics=("parallel",),   # megacore-shard row blocks (v7x)
                vmem_limit_bytes=32 * 1024 * 1024,   # sized for v7x's 64 MiB physical
            ),
            cost_estimate=cost,
        )

    try:
        out = _build(True)(x2d, e3, centers)
    except Exception:
        # Fallback if this Pallas version rejects pipeline_mode=Buffered(1) on
        # constant-index inputs; costs only an extra resident buffer (~772 KiB).
        out = _build(False)(x2d, e3, centers)

    # (rows, 128*G) row-major == (rows*128, G) row-major: bitcast reshape (no
    # transpose).  See layout note at the top if a consumer pins a different
    # layout for the (..., G=8) result.
    out = out.reshape(rows * LANE, num_grids)
    if pad:
        out = out[:n]
    return out.reshape(*orig_shape, num_grids)
    # TODO(synk): purge_vram() (torch.cuda.empty_cache / gc.collect) has no JAX
    # equivalent and is a memory-management side effect, not compute.


if __name__ == "__main__":
    key = jax.random.PRNGKey(0)
    grid_min, grid_max, G = -1.5, 1.5, 8
    grid_vals = jnp.linspace(grid_min, grid_max, G, dtype=jnp.float32)
    den = (grid_max - grid_min) / (G - 1)

    def ref_fn(x):
        return jnp.exp(-(((x[..., None] - grid_vals) / den) ** 2))

    cases = [
        ("conv_features", (2, 4, 16, 16)),   # 2 even blocks, no padding
        ("multi_block", (2, 3, 40, 40)),     # 2 steps, partial last block
        ("ragged", (2, 1000)),               # needs lane padding + output slice
    ]
    for name, shape in cases:
        key, sub = jax.random.split(key)
        x = jax.random.normal(sub, shape, dtype=jnp.float32) * 2.0
        out = radial_basis_function(x, min_pallas_elements=0)   # force Pallas kernel
        out = jax.block_until_ready(out)
        ref = ref_fn(x)
        assert out.shape == shape + (G,), (name, out.shape)
        err = float(jnp.max(jnp.abs(out - ref)))
        assert err < 1e-5, (name, err)

    # bf16 fast-path output through the Pallas kernel.
    key, sub = jax.random.split(key)
    xb = jax.random.normal(sub, (2, 4, 16, 16), dtype=jnp.float32)
    out_bf16 = jax.block_until_ready(
        radial_basis_function(xb, out_dtype=jnp.bfloat16, min_pallas_elements=0))
    assert out_bf16.dtype == jnp.bfloat16
    assert float(jnp.max(jnp.abs(out_bf16.astype(jnp.float32) - ref_fn(xb)))) < 8e-3

    # Default call on a tiny input exercises the pure-JAX fast path.
    x_small = jax.random.normal(jax.random.PRNGKey(0), (2, 4, 16, 16), dtype=jnp.float32)
    out_small = jax.block_until_ready(radial_basis_function(x_small))
    assert out_small.shape == (2, 4, 16, 16, 8)
    assert jnp.allclose(out_small, ref_fn(x_small), atol=1e-6, rtol=1e-6)

    print("KERNEL_OK")
</pallas_src>

<mosaic_0001>
module attributes {stable_mosaic.version = 11 : i64} {
  func.func @_rbf_kernel(%arg0: i32, %arg1: memref<8x128xf32, #tpu.memory_space<vmem>>, %arg2: memref<384x1024xbf16, #tpu.memory_space<vmem>>, %arg3: memref<1x1024xf32, #tpu.memory_space<vmem>>, %arg4: memref<8x1024xf32, #tpu.memory_space<vmem>>) attributes {dimension_semantics = [#tpu.dimension_semantics<parallel>], iteration_bounds = array<i64: 2>, scalar_prefetch = 0 : i64, scratch_operands = 0 : i64, tpu.core_type = #tpu.core_type<tc>, window_params = [{transform_indices = @transform_0, window_bounds = array<i64: 8, 128>}, {pipeline_mode = #tpu.pipeline_mode<synchronous>, transform_indices = @transform_1, window_bounds = array<i64: 384, 1024>}, {pipeline_mode = #tpu.pipeline_mode<synchronous>, transform_indices = @transform_2, window_bounds = array<i64: 1, 1024>}, {transform_indices = @transform_3, window_bounds = array<i64: 8, 1024>}]} {
    %c0 = arith.constant 0 : index
    %c0_0 = arith.constant 0 : index
    %0 = vector.load %arg1[%c0, %c0_0] : memref<8x128xf32, #tpu.memory_space<vmem>>, vector<8x128xf32>
    %cst = arith.constant 2.33333325 : f32
    %1 = vector.broadcast %cst : f32 to vector<8x128xf32>
    %2 = arith.mulf %0, %1 : vector<8x128xf32>
    %cst_1 = arith.constant -1.000000e+06 : f32
    %cst_2 = arith.constant 1.000000e+06 : f32
    %3 = vector.broadcast %cst_1 : f32 to vector<8x128xf32>
    %4 = arith.maximumf %3, %2 : vector<8x128xf32>
    %5 = vector.broadcast %cst_2 : f32 to vector<8x128xf32>
    %6 = arith.minimumf %5, %4 : vector<8x128xf32>
    %7 = arith.truncf %6 : vector<8x128xf32> to vector<8x128xbf16>
    %8 = arith.extf %7 : vector<8x128xbf16> to vector<8x128xf32>
    %9 = arith.subf %6, %8 : vector<8x128xf32>
    %10 = arith.truncf %9 : vector<8x128xf32> to vector<8x128xbf16>
    %11 = arith.extf %10 : vector<8x128xbf16> to vector<8x128xf32>
    %12 = arith.subf %9, %11 : vector<8x128xf32>
    %13 = arith.truncf %12 : vector<8x128xf32> to vector<8x128xbf16>
    %14 = tpu.concatenate %7, %10, %13 in 1 : vector<8x128xbf16>, vector<8x128xbf16>, vector<8x128xbf16> -> vector<8x384xbf16>
    %c0_3 = arith.constant 0 : index
    %c0_4 = arith.constant 0 : index
    %15 = vector.load %arg2[%c0_3, %c0_4] : memref<384x1024xbf16, #tpu.memory_space<vmem>>, vector<384x1024xbf16>
    %cst_5 = arith.constant dense<0.000000e+00> : vector<8x1024xf32>
    %16 = tpu.matmul %14, %15, %cst_5 {dimension_numbers = #tpu.dot_dimension_numbers<[1], [0], [0], [1], [0, 0, 1, 1], [], []>} : vector<8x384xbf16>, vector<384x1024xbf16>, vector<8x1024xf32> -> vector<8x1024xf32>
    %c0_6 = arith.constant 0 : index
    %c0_7 = arith.constant 0 : index
    %17 = vector.load %arg3[%c0_6, %c0_7] : memref<1x1024xf32, #tpu.memory_space<vmem>>, vector<1x1024xf32>
    %18 = vector.broadcast %17 : vector<1x1024xf32> to vector<8x1024xf32>
    %19 = arith.subf %16, %18 : vector<8x1024xf32>
    %20 = arith.mulf %19, %19 : vector<8x1024xf32>
    %cst_8 = arith.constant 0.000000e+00 : f32
    %21 = vector.broadcast %cst_8 : f32 to vector<8x1024xf32>
    %22 = arith.subf %21, %20 : vector<8x1024xf32>
    %23 = math.exp %22 : vector<8x1024xf32>
    %c0_9 = arith.constant 0 : index
    %c0_10 = arith.constant 0 : index
    %24 = vector.load %arg4[%c0_9, %c0_10] : memref<8x1024xf32, #tpu.memory_space<vmem>>, vector<8x1024xf32>
    tpu.vector_store %arg4[%c0_9, %c0_10], %23 {strides = array<i32>} : memref<8x1024xf32, #tpu.memory_space<vmem>>, vector<8x1024xf32>,
    return
  }
  func.func @transform_0(%arg0: i32) -> (i32, i32) {
    %c0_i32 = arith.constant 0 : i32
    %c0_i32_0 = arith.constant 0 : i32
    return %arg0, %c0_i32 : i32, i32
  }
  func.func @transform_1(%arg0: i32) -> (i32, i32) {
    %c0_i32 = arith.constant 0 : i32
    %c0_i32_0 = arith.constant 0 : i32
    %c0_i32_1 = arith.constant 0 : i32
    return %c0_i32, %c0_i32_0 : i32, i32
  }
  func.func @transform_2(%arg0: i32) -> (i32, i32) {
    %c0_i32 = arith.constant 0 : i32
    %c0_i32_0 = arith.constant 0 : i32
    %c0_i32_1 = arith.constant 0 : i32
    return %c0_i32, %c0_i32_0 : i32, i32
  }
  func.func @transform_3(%arg0: i32) -> (i32, i32) {
    %c0_i32 = arith.constant 0 : i32
    %c0_i32_0 = arith.constant 0 : i32
    return %arg0, %c0_i32 : i32, i32
  }
}

module attributes {stable_mosaic.version = 11 : i64} {
  func.func @_rbf_kernel(%arg0: i32, %arg1: memref<8x128xf32, #tpu.memory_space<vmem>>, %arg2: memref<384x1024xbf16, #tpu.memory_space<vmem>>, %arg3: memref<1x1024xf32, #tpu.memory_space<vmem>>, %arg4: memref<8x1024xf32, #tpu.memory_space<vmem>>) attributes {dimension_semantics = [#tpu.dimension_semantics<parallel>], iteration_bounds = array<i64: 2>, scalar_prefetch = 0 : i64, scratch_operands = 0 : i64, tpu.core_type = #tpu.core_type<tc>, window_params = [{transform_indices = @transform_0, window_bounds = array<i64: 8, 128>}, {pipeline_mode = #tpu.pipeline_mode<synchronous>, transform_indices = @transform_1, window_bounds = array<i64: 384, 1024>}, {pipeline_mode = #tpu.pipeline_mode<synchronous>, transform_indices = @transform_2, window_bounds = array<i64: 1, 1024>}, {transform_indices = @transform_3, window_bounds = array<i64: 8, 1024>}]} {
    %c0 = arith.constant 0 : index
    %c0_0 = arith.constant 0 : index
    %0 = vector.load %arg1[%c0, %c0_0] : memref<8x128xf32, #tpu.memory_space<vmem>>, vector<8x128xf32>
    %cst = arith.constant 2.33333325 : f32
    %1 = vector.broadcast %cst : f32 to vector<8x128xf32>
    %2 = arith.mulf %0, %1 : vector<8x128xf32>
    %cst_1 = arith.constant -1.000000e+06 : f32
    %cst_2 = arith.constant 1.000000e+06 : f32
    %3 = vector.broadcast %cst_1 : f32 to vector<8x128xf32>
    %4 = arith.maximumf %3, %2 : vector<8x128xf32>
    %5 = vector.broadcast %cst_2 : f32 to vector<8x128xf32>
    %6 = arith.minimumf %5, %4 : vector<8x128xf32>
    %7 = arith.truncf %6 : vector<8x128xf32> to vector<8x128xbf16>
    %8 = arith.extf %7 : vector<8x128xbf16> to vector<8x128xf32>
    %9 = arith.subf %6, %8 : vector<8x128xf32>
    %10 = arith.truncf %9 : vector<8x128xf32> to vector<8x128xbf16>
    %11 = arith.extf %10 : vector<8x128xbf16> to vector<8x128xf32>
    %12 = arith.subf %9, %11 : vector<8x128xf32>
    %13 = arith.truncf %12 : vector<8x128xf32> to vector<8x128xbf16>
    %14 = tpu.concatenate %7, %10, %13 in 1 : vector<8x128xbf16>, vector<8x128xbf16>, vector<8x128xbf16> -> vector<8x384xbf16>
    %c0_3 = arith.constant 0 : index
    %c0_4 = arith.constant 0 : index
    %15 = vector.load %arg2[%c0_3, %c0_4] : memref<384x1024xbf16, #tpu.memory_space<vmem>>, vector<384x1024xbf16>
    %cst_5 = arith.constant dense<0.000000e+00> : vector<8x1024xf32>
    %16 = tpu.matmul %14, %15, %cst_5 {dimension_numbers = #tpu.dot_dimension_numbers<[1], [0], [0], [1], [0, 0, 1, 1], [], []>} : vector<8x384xbf16>, vector<384x1024xbf16>, vector<8x1024xf32> -> vector<8x1024xf32>
    %c0_6 = arith.constant 0 : index
    %c0_7 = arith.constant 0 : index
    %17 = vector.load %arg3[%c0_6, %c0_7] : memref<1x1024xf32, #tpu.memory_space<vmem>>, vector<1x1024xf32>
    %18 = vector.broadcast %17 : vector<1x1024xf32> to vector<8x1024xf32>
    %19 = arith.subf %16, %18 : vector<8x1024xf32>
    %20 = arith.mulf %19, %19 : vector<8x1024xf32>
    %cst_8 = arith.constant 0.000000e+00 : f32
    %21 = vector.broadcast %cst_8 : f32 to vector<8x1024xf32>
    %22 = arith.subf %21, %20 : vector<8x1024xf32>
    %23 = math.exp %22 : vector<8x1024xf32>
    %c0_9 = arith.constant 0 : index
    %c0_10 = arith.constant 0 : index
    %24 = vector.load %arg4[%c0_9, %c0_10] : memref<8x1024xf32, #tpu.memory_space<vmem>>, vector<8x1024xf32>
    tpu.vector_store %arg4[%c0_9, %c0_10], %23 {strides = array<i32>} : memref<8x1024xf32, #tpu.memory_space<vmem>>, vector<8x1024xf32>,
    return
  }
  func.func @transform_0(%arg0: i32) -> (i32, i32) {
    %c0_i32 = arith.constant 0 : i32
    %c0_i32_0 = arith.constant 0 : i32
    return %arg0, %c0_i32 : i32, i32
  }
  func.func @transform_1(%arg0: i32) -> (i32, i32) {
    %c0_i32 = arith.constant 0 : i32
    %c0_i32_0 = arith.constant 0 : i32
    %c0_i32_1 = arith.constant 0 : i32
    return %c0_i32, %c0_i32_0 : i32, i32
  }
  func.func @transform_2(%arg0: i32) -> (i32, i32) {
    %c0_i32 = arith.constant 0 : i32
    %c0_i32_0 = arith.constant 0 : i32
    %c0_i32_1 = arith.constant 0 : i32
    return %c0_i32, %c0_i32_0 : i32, i32
  }
  func.func @transform_3(%arg0: i32) -> (i32, i32) {
    %c0_i32 = arith.constant 0 : i32
    %c0_i32_0 = arith.constant 0 : i32
    return %arg0, %c0_i32 : i32, i32
  }
}

</mosaic_0001>

<llo_original>
// kernel: tpu_custom_call.1
$region0: #{tpu_custom_call.1}
  #allocation0 [shape = 'u32[]', space=smem, size = 0x4, offset = 0x4, fixed_abs, tag = 'smem constant byte address 0x4 - core index']
  #allocation1 [shape = 'u32[72,128]{1,0:T(1,128)}', space=vmem, size = 0x9000, scoped, tag = 'internal scratch']
  %s0 = inlined_call_operand.hbm [shape: f32[16,128], index: 0, kind: input, shape index: {}]
  %s1 = inlined_call_operand.hbm [shape: bf16[384,1024], index: 1, kind: input, shape index: {}]
  %s2 = inlined_call_operand.hbm [shape: f32[1,1024], index: 2, kind: input, shape index: {}]
  %s3 = inlined_call_operand.hbm [shape: f32[16,1024], index: 3, kind: output, shape index: {}]
  %s4 = sld [smem:[#allocation0]]
  $region57: #{tpu_custom_call.1} parent=0
    _
  %s6 = ssub.s32 1, %s4
  %s7 = scalar_select 0, %s6, %s4
  $region1: #{tpu_custom_call.1} parent=0
    #allocation2 [shape = 'u8[8192]{0}', space=vmem, size = 0x2000, scoped, tag = 'input window, operand 0']
    #allocation3 [shape = 's32[2]{0}', space=sflag, size = 0x8, scoped, tag = 'scoped memory for tpu_custom_call.1']
    #allocation4 [shape = 's32[2]{0}', space=sflag, size = 0x8, scoped, tag = 'scoped memory for tpu_custom_call.1']
    #allocation5 [shape = 'u8[786432]{0}', space=vmem, size = 0xc0000, scoped, tag = 'input window, operand 1, single buffered']
    #allocation6 [shape = 's32[1]{0}', space=sflag, size = 0x4, scoped, tag = 'scoped memory for tpu_custom_call.1']
    #allocation7 [shape = 'u8[4096]{0}', space=vmem, size = 0x1000, scoped, tag = 'input window, operand 2, single buffered']
    #allocation8 [shape = 'u8[65536]{0}', space=vmem, size = 0x10000, scoped, tag = 'output window, operand 0']
    %8 = vsyncpa [#allocation3], 0
    %s9 = scalar_lea.sflag [#allocation3], 1
    %10 = vsyncpa %s9, 0
    %11 = vsyncpa [#allocation6], 0
    %12 = vsyncpa [#allocation4], 0
    %s13 = scalar_lea.sflag [#allocation4], 1
    %14 = vsyncpa %s13, 0
    loop: start=0, step=1, limit=4
    $region2: #{tpu_custom_call.1} parent=1 // loop_pre_header
      _
    $region3: #{tpu_custom_call.1} parent=1 // loop_header
      %s16 = sphi 0, %s20
      %p17 = scmp.ge.s32.totalorder %s16, 4
      %s26 = sphi 0, %s28
      %s29 = sphi 0, %s26
      %s30 = sphi 0, %s29
      %s46 = sphi 0, %s30
      %s50 = sphi 0, %s50
      %s52 = sphi 0, %s50
      %s53 = sphi 0, %s52
      %s67 = sphi 0, %s53
      %s71 = sphi 0, %s71
      %s73 = sphi 0, %s71
      %s74 = sphi 0, %s73
      %s88 = sphi 0, %s74
      %s94 = sphi 0, %s96
      %s97 = sphi 0, %s94
      %s98 = sphi 0, %s97
      %s114 = sphi 0, %s98
    $region4: #{tpu_custom_call.1} parent=1 // loop_header_branch
      %19 = sbr.rel (%p17) target = $region8
    $region5: #{tpu_custom_call.1} parent=1 // loop_body
      %s21 = ssub.s32 %s16, 1
      %s22 = ssub.s32 %s16, 2
      %s23 = sadd.s32 %s16, 1
      %s24 = ssub.s32 %s16, %s23
      %p25 = scmp.eq.s32.totalorder %s24, 0
      %s27 = sadd.s32 %s26, 1
      %s28 = scalar_select %p25, %s26, %s27
      %p31 = pneg %p25
      %p32 = scmp.eq.s32.totalorder %s16, 1
      %p33 = por %p31, %p32
      %p34 = scmp.ne.s32.totalorder %s26, %s29
      %p35 = scmp.eq.s32.totalorder %s16, 0
      %p36 = por %p34, %p35
      %p37 = scmp.ne.s32.totalorder %s26, %s29
      %p38 = scmp.eq.s32.totalorder %s21, 1
      %p39 = por %p37, %p38
      %p40 = scmp.ne.s32.totalorder %s29, %s30
      %p41 = scmp.eq.s32.totalorder %s21, 0
      %p42 = por %p40, %p41
      %p43 = scmp.ne.s32.totalorder %s29, %s30
      %p44 = scmp.eq.s32.totalorder %s22, 1
      %p45 = por %p43, %p44
      %p47 = scmp.ne.s32.totalorder %s30, %s46
      %p48 = scmp.eq.s32.totalorder %s22, 0
      %p49 = por %p47, %p48
      %s51 = sadd.s32 %s50, 1
      %p54 = scmp.eq.s32.totalorder %s16, 1
      %p55 = scmp.ne.s32.totalorder %s50, %s52
      %p56 = scmp.eq.s32.totalorder %s16, 0
      %p57 = por %p55, %p56
      %p58 = scmp.ne.s32.totalorder %s50, %s52
      %p59 = scmp.eq.s32.totalorder %s21, 1
      %p60 = por %p58, %p59
      %p61 = scmp.ne.s32.totalorder %s52, %s53
      %p62 = scmp.eq.s32.totalorder %s21, 0
      %p63 = por %p61, %p62
      %p64 = scmp.ne.s32.totalorder %s52, %s53
      %p65 = scmp.eq.s32.totalorder %s22, 1
      %p66 = por %p64, %p65
      %p68 = scmp.ne.s32.totalorder %s53, %s67
      %p69 = scmp.eq.s32.totalorder %s22, 0
      %p70 = por %p68, %p69
      %s72 = sadd.s32 %s71, 1
      %p75 = scmp.eq.s32.totalorder %s16, 1
      %p76 = scmp.ne.s32.totalorder %s71, %s73
      %p77 = scmp.eq.s32.totalorder %s16, 0
      %p78 = por %p76, %p77
      %p79 = scmp.ne.s32.totalorder %s71, %s73
      %p80 = scmp.eq.s32.totalorder %s21, 1
      %p81 = por %p79, %p80
      %p82 = scmp.ne.s32.totalorder %s73, %s74
      %p83 = scmp.eq.s32.totalorder %s21, 0
      %p84 = por %p82, %p83
      %p85 = scmp.ne.s32.totalorder %s73, %s74
      %p86 = scmp.eq.s32.totalorder %s22, 1
      %p87 = por %p85, %p86
      %p89 = scmp.ne.s32.totalorder %s74, %s88
      %p90 = scmp.eq.s32.totalorder %s22, 0
      %p91 = por %p89, %p90
      %s92 = ssub.s32 %s16, %s23
      %p93 = scmp.eq.s32.totalorder %s92, 0
      %s95 = sadd.s32 %s94, 1
      %s96 = scalar_select %p93, %s94, %s95
      %p99 = pneg %p93
      %p100 = scmp.eq.s32.totalorder %s16, 1
      %p101 = por %p99, %p100
      %p102 = scmp.ne.s32.totalorder %s94, %s97
      %p103 = scmp.eq.s32.totalorder %s16, 0
      %p104 = por %p102, %p103
      %p105 = scmp.ne.s32.totalorder %s94, %s97
      %p106 = scmp.eq.s32.totalorder %s21, 1
      %p107 = por %p105, %p106
      %p108 = scmp.ne.s32.totalorder %s97, %s98
      %p109 = scmp.eq.s32.totalorder %s21, 0
      %p110 = por %p108, %p109
      %p111 = scmp.ne.s32.totalorder %s97, %s98
      %p112 = scmp.eq.s32.totalorder %s22, 1
      %p113 = por %p111, %p112
      %p115 = scmp.ne.s32.totalorder %s98, %s114
      %p116 = scmp.eq.s32.totalorder %s22, 0
      %p117 = por %p115, %p116
      %p118 = scmp.le.s32.totalorder 1, %s16
      %p119 = scmp.lt.s32.totalorder %s16, 3
      %p120 = pnand %p118, %p119
      %p121 = pneg %p120
      // Predicated region
      $region9: #{tpu_custom_call.1} parent=5 // pred_check
        _
      $region10: #{tpu_custom_call.1} parent=5 // pred_check_branch
        %123 = sbr.rel (%p120) target = $region12
      $region11: #{tpu_custom_call.1} parent=5 // pred_region
        %s124 = ssub.s32 %s16, 1
        // Predicated region
        $region13: #{tpu_custom_call.1} parent=11 // pred_check
          %p125 = pneg %p63
        $region14: #{tpu_custom_call.1} parent=11 // pred_check_branch
          %127 = sbr.rel (%p125) target = $region16
        $region15: #{tpu_custom_call.1} parent=11 // pred_region
          %129 = vsyncadd [#allocation6], 0
          %s130 = sshll.u32 %s1, 4
          %s131 = int_to_ptr.hbm [resolvable:$true] %s130
          %s132 = sshll.u32 [#allocation5], 4
          %s133 = int_to_ptr.vmem [resolvable:$true] %s132
          %138 = dma.hbm_to_vmem [thread:$0]  %s131, 24576, %s133, [#allocation6], 512, 512, 32
        $region16: #{tpu_custom_call.1} parent=11 // pred_fallthru
          _
        // Predicated region
        $region17: #{tpu_custom_call.1} parent=11 // pred_check
          %p139 = pneg %p84
        $region18: #{tpu_custom_call.1} parent=11 // pred_check_branch
          %141 = sbr.rel (%p139) target = $region20
        $region19: #{tpu_custom_call.1} parent=11 // pred_region
          %143 = vsyncadd [#allocation6], 0
          %s145 = sshll.u32 %s2, 4
          %s146 = int_to_ptr.hbm [resolvable:$true] %s145
          %s147 = sshll.u32 [#allocation7], 4
          %s148 = int_to_ptr.vmem [resolvable:$true] %s147
          %150 = dma.hbm_to_vmem [thread:$0]  %s146, 128, %s148, [#allocation6]
        $region20: #{tpu_custom_call.1} parent=11 // pred_fallthru
          _
      $region12: #{tpu_custom_call.1} parent=5 // pred_fallthru
        _
      %p151 = scmp.lt.s32.totalorder %s16, 2
      // Predicated region
      $region21: #{tpu_custom_call.1} parent=5 // pred_check
        %p152 = pneg %p151
      $region22: #{tpu_custom_call.1} parent=5 // pred_check_branch
        %154 = sbr.rel (%p152) target = $region24
      $region23: #{tpu_custom_call.1} parent=5 // pred_region
        // Predicated region
        $region25: #{tpu_custom_call.1} parent=23 // pred_check
          %p155 = pneg %p36
        $region26: #{tpu_custom_call.1} parent=23 // pred_check_branch
          %157 = sbr.rel (%p155) target = $region28
        $region27: #{tpu_custom_call.1} parent=23 // pred_region
          %s158 = sand.u32 %s26, 1
          %s159 = scalar_lea.sflag [#allocation3], %s158
          %s160 = sand.u32 %s26, 1
          %s161 = smul.addr %s160, 8
          %s162 = scalar_lea.vmem [#allocation2], %s161
          %164 = vsyncadd %s159, 0
          %s165 = smul.addr %s16, 8
          %s166 = scalar_lea.hbm %s0, %s165
          %s168 = sshll.u32 %s166, 4
          %s169 = int_to_ptr.hbm [resolvable:$true] %s168
          %s170 = sshll.u32 %s162, 4
          %s171 = int_to_ptr.vmem [resolvable:$true] %s170
          %173 = dma.hbm_to_vmem [thread:$0]  %s169, 128, %s171, %s159
        $region28: #{tpu_custom_call.1} parent=23 // pred_fallthru
          _
      $region24: #{tpu_custom_call.1} parent=5 // pred_fallthru
        _
      %p174 = scmp.le.s32.totalorder 1, %s16
      %p175 = scmp.lt.s32.totalorder %s16, 3
      %p176 = pnand %p174, %p175
      %p177 = pneg %p176
      // Predicated region
      $region29: #{tpu_custom_call.1} parent=5 // pred_check
        _
      $region30: #{tpu_custom_call.1} parent=5 // pred_check_branch
        %179 = sbr.rel (%p176) target = $region32
      $region31: #{tpu_custom_call.1} parent=5 // pred_region
        %s180 = ssub.s32 %s16, 1
        %s181 = sand.u32 %s29, 1
        %s182 = scalar_lea.sflag [#allocation3], %s181
        %s183 = sand.u32 %s29, 1
        %s184 = smul.addr %s183, 8
        %s185 = scalar_lea.vmem [#allocation2], %s184
        // Predicated region
        $region33: #{tpu_custom_call.1} parent=31 // pred_check
          %p186 = pneg %p42
        $region34: #{tpu_custom_call.1} parent=31 // pred_check_branch
          %188 = sbr.rel (%p186) target = $region36
        $region35: #{tpu_custom_call.1} parent=31 // pred_region
          %190 = dma.done %s182, 128
        $region36: #{tpu_custom_call.1} parent=31 // pred_fallthru
          _
        // Predicated region
        $region37: #{tpu_custom_call.1} parent=31 // pred_check
          %p191 = pneg %p63
        $region38: #{tpu_custom_call.1} parent=31 // pred_check_branch
          %193 = sbr.rel (%p191) target = $region40
        $region39: #{tpu_custom_call.1} parent=31 // pred_region
          %195 = dma.done [#allocation6], 24576
        $region40: #{tpu_custom_call.1} parent=31 // pred_fallthru
          _
        // Predicated region
        $region41: #{tpu_custom_call.1} parent=31 // pred_check
          %p196 = pneg %p84
        $region42: #{tpu_custom_call.1} parent=31 // pred_check_branch
          %198 = sbr.rel (%p196) target = $region44
        $region43: #{tpu_custom_call.1} parent=31 // pred_region
          %200 = dma.done [#allocation6], 128
        $region44: #{tpu_custom_call.1} parent=31 // pred_fallthru
          _
        %s201 = sand.u32 %s29, 1
        %s202 = scalar_lea.sflag [#allocation3], %s201
        %s203 = sand.u32 %s29, 1
        %s204 = smul.addr %s203, 8
        %s205 = scalar_lea.vmem [#allocation2], %s204
        %p206 = pneg %p42
        %p207 = pneg %p39
        %p208 = pneg %p63
        %p209 = pneg %p60
        %p210 = pneg %p84
        %p211 = pneg %p81
        %p212 = pneg %p110
        %p213 = pneg %p107
        %s214 = sand.u32 %s97, 1
        %s215 = scalar_lea.sflag [#allocation4], %s214
        %s216 = sand.u32 %s97, 1
        %s217 = smul.addr %s216, 64
        %s218 = scalar_lea.vmem [#allocation8], %s217
        %v219 = vld [vmem:[%s185] sm:$0xff]
        %v220 = vmul.f32 %v219, 2.3333333
        %v221 = vmax.f32 %v220, -1000000.0
        %v222 = vmin.f32 %v221, 1000000.0
        %v223 = vpack.c.bf16 %v222, %v222
        %v224 = vunpack.c.l.bf16 %v223
        %v225 = vsub.f32 %v222, %v224
        %v226 = vpack.c.bf16 %v225, %v225
        %v227 = vunpack.c.l.bf16 %v226
        %v228 = vsub.f32 %v225, %v227
        %v229 = vpack.c.bf16 %v228, %v228
        %v230 = vld [vmem:[#allocation5] sm:$0xff]
        %v231 = vld [vmem:[#allocation5 + $0x8] sm:$0xff]
        %v232 = vld [vmem:[#allocation5 + $0x10] sm:$0xff]
        %v233 = vld [vmem:[#allocation5 + $0x18] sm:$0xff]
        %v234 = vld [vmem:[#allocation5 + $0x20] sm:$0xff]
        %v235 = vld [vmem:[#allocation5 + $0x28] sm:$0xff]
        %v236 = vld [vmem:[#allocation5 + $0x30] sm:$0xff]
        %v237 = vld [vmem:[#allocation5 + $0x38] sm:$0xff]
        %v238 = vld [vmem:[#allocation5 + $0x40] sm:$0xff]
        %v239 = vld [vmem:[#allocation5 + $0x48] sm:$0xff]
        %v240 = vld [vmem:[#allocation5 + $0x50] sm:$0xff]
        %v241 = vld [vmem:[#allocation5 + $0x58] sm:$0xff]
        %v242 = vld [vmem:[#allocation5 + $0x60] sm:$0xff]
        %v243 = vld [vmem:[#allocation5 + $0x68] sm:$0xff]
        %v244 = vld [vmem:[#allocation5 + $0x70] sm:$0xff]
        %v245 = vld [vmem:[#allocation5 + $0x78] sm:$0xff]
        %v246 = vld [vmem:[#allocation5 + $0x80] sm:$0xff]
        %v247 = vld [vmem:[#allocation5 + $0x88] sm:$0xff]
        %v248 = vld [vmem:[#allocation5 + $0x90] sm:$0xff]
        %v249 = vld [vmem:[#allocation5 + $0x98] sm:$0xff]
        %v250 = vld [vmem:[#allocation5 + $0xa0] sm:$0xff]
        %v251 = vld [vmem:[#allocation5 + $0xa8] sm:$0xff]
        %v252 = vld [vmem:[#allocation5 + $0xb0] sm:$0xff]
        %v253 = vld [vmem:[#allocation5 + $0xb8] sm:$0xff]
        %v254 = vld [vmem:[#allocation5 + $0xc0] sm:$0xff]
        %v255 = vld [vmem:[#allocation5 + $0xc8] sm:$0xff]
        %v256 = vld [vmem:[#allocation5 + $0xd0] sm:$0xff]
        %v257 = vld [vmem:[#allocation5 + $0xd8] sm:$0xff]
        %v258 = vld [vmem:[#allocation5 + $0xe0] sm:$0xff]
        %v259 = vld [vmem:[#allocation5 + $0xe8] sm:$0xff]
        %v260 = vld [vmem:[#allocation5 + $0xf0] sm:$0xff]
        %v261 = vld [vmem:[#allocation5 + $0xf8] sm:$0xff]
        %v262 = vld [vmem:[#allocation5 + $0x100] sm:$0xff]
        %v263 = vld [vmem:[#allocation5 + $0x108] sm:$0xff]
        %v264 = vld [vmem:[#allocation5 + $0x110] sm:$0xff]
        %v265 = vld [vmem:[#allocation5 + $0x118] sm:$0xff]
        %v266 = vld [vmem:[#allocation5 + $0x120] sm:$0xff]
        %v267 = vld [vmem:[#allocation5 + $0x128] sm:$0xff]
        %v268 = vld [vmem:[#allocation5 + $0x130] sm:$0xff]
        %v269 = vld [vmem:[#allocation5 + $0x138] sm:$0xff]
        %v270 = vld [vmem:[#allocation5 + $0x140] sm:$0xff]
        %v271 = vld [vmem:[#allocation5 + $0x148] sm:$0xff]
        %v272 = vld [vmem:[#allocation5 + $0x150] sm:$0xff]
        %v273 = vld [vmem:[#allocation5 + $0x158] sm:$0xff]
        %v274 = vld [vmem:[#allocation5 + $0x160] sm:$0xff]
        %v275 = vld [vmem:[#allocation5 + $0x168] sm:$0xff]
        %v276 = vld [vmem:[#allocation5 + $0x170] sm:$0xff]
        %v277 = vld [vmem:[#allocation5 + $0x178] sm:$0xff]
        %v278 = vld [vmem:[#allocation5 + $0x180] sm:$0xff]
        %v279 = vld [vmem:[#allocation5 + $0x188] sm:$0xff]
        %v280 = vld [vmem:[#allocation5 + $0x190] sm:$0xff]
        %v281 = vld [vmem:[#allocation5 + $0x198] sm:$0xff]
        %v282 = vld [vmem:[#allocation5 + $0x1a0] sm:$0xff]
        %v283 = vld [vmem:[#allocation5 + $0x1a8] sm:$0xff]
        %v284 = vld [vmem:[#allocation5 + $0x1b0] sm:$0xff]
        %v285 = vld [vmem:[#allocation5 + $0x1b8] sm:$0xff]
        %v286 = vld [vmem:[#allocation5 + $0x1c0] sm:$0xff]
        %v287 = vld [vmem:[#allocation5 + $0x1c8] sm:$0xff]
        %v288 = vld [vmem:[#allocation5 + $0x1d0] sm:$0xff]
        %v289 = vld [vmem:[#allocation5 + $0x1d8] sm:$0xff]
        %v290 = vld [vmem:[#allocation5 + $0x1e0] sm:$0xff]
        %v291 = vld [vmem:[#allocation5 + $0x1e8] sm:$0xff]
        %v292 = vld [vmem:[#allocation5 + $0x1f0] sm:$0xff]
        %v293 = vld [vmem:[#allocation5 + $0x1f8] sm:$0xff]
        %v294 = vld [vmem:[#allocation5 + $0x200] sm:$0xff]
        %v295 = vld [vmem:[#allocation5 + $0x208] sm:$0xff]
        %v296 = vld [vmem:[#allocation5 + $0x210] sm:$0xff]
        %v297 = vld [vmem:[#allocation5 + $0x218] sm:$0xff]
        %v298 = vld [vmem:[#allocation5 + $0x220] sm:$0xff]
        %v299 = vld [vmem:[#allocation5 + $0x228] sm:$0xff]
        %v300 = vld [vmem:[#allocation5 + $0x230] sm:$0xff]
        %v301 = vld [vmem:[#allocation5 + $0x238] sm:$0xff]
        %v302 = vld [vmem:[#allocation5 + $0x240] sm:$0xff]
        %v303 = vld [vmem:[#allocation5 + $0x248] sm:$0xff]
        %v304 = vld [vmem:[#allocation5 + $0x250] sm:$0xff]
        %v305 = vld [vmem:[#allocation5 + $0x258] sm:$0xff]
        %v306 = vld [vmem:[#allocation5 + $0x260] sm:$0xff]
        %v307 = vld [vmem:[#allocation5 + $0x268] sm:$0xff]
        %v308 = vld [vmem:[#allocation5 + $0x270] sm:$0xff]
        %v309 = vld [vmem:[#allocation5 + $0x278] sm:$0xff]
        %v310 = vld [vmem:[#allocation5 + $0x280] sm:$0xff]
        %v311 = vld [vmem:[#allocation5 + $0x288] sm:$0xff]
        %v312 = vld [vmem:[#allocation5 + $0x290] sm:$0xff]
        %v313 = vld [vmem:[#allocation5 + $0x298] sm:$0xff]
        %v314 = vld [vmem:[#allocation5 + $0x2a0] sm:$0xff]
        %v315 = vld [vmem:[#allocation5 + $0x2a8] sm:$0xff]
        %v316 = vld [vmem:[#allocation5 + $0x2b0] sm:$0xff]
        %v317 = vld [vmem:[#allocation5 + $0x2b8] sm:$0xff]
        %v318 = vld [vmem:[#allocation5 + $0x2c0] sm:$0xff]
        %v319 = vld [vmem:[#allocation5 + $0x2c8] sm:$0xff]
        %v320 = vld [vmem:[#allocation5 + $0x2d0] sm:$0xff]
        %v321 = vld [vmem:[#allocation5 + $0x2d8] sm:$0xff]
        %v322 = vld [vmem:[#allocation5 + $0x2e0] sm:$0xff]
        %v323 = vld [vmem:[#allocation5 + $0x2e8] sm:$0xff]
        %v324 = vld [vmem:[#allocation5 + $0x2f0] sm:$0xff]
        %v325 = vld [vmem:[#allocation5 + $0x2f8] sm:$0xff]
        %v326 = vld [vmem:[#allocation5 + $0x300] sm:$0xff]
        %v327 = vld [vmem:[#allocation5 + $0x308] sm:$0xff]
        %v328 = vld [vmem:[#allocation5 + $0x310] sm:$0xff]
        %v329 = vld [vmem:[#allocation5 + $0x318] sm:$0xff]
        %v330 = vld [vmem:[#allocation5 + $0x320] sm:$0xff]
        %v331 = vld [vmem:[#allocation5 + $0x328] sm:$0xff]
        %v332 = vld [vmem:[#allocation5 + $0x330] sm:$0xff]
        %v333 = vld [vmem:[#allocation5 + $0x338] sm:$0xff]
        %v334 = vld [vmem:[#allocation5 + $0x340] sm:$0xff]
        %v335 = vld [vmem:[#allocation5 + $0x348] sm:$0xff]
        %v336 = vld [vmem:[#allocation5 + $0x350] sm:$0xff]
        %v337 = vld [vmem:[#allocation5 + $0x358] sm:$0xff]
        %v338 = vld [vmem:[#allocation5 + $0x360] sm:$0xff]
        %v339 = vld [vmem:[#allocation5 + $0x368] sm:$0xff]
        %v340 = vld [vmem:[#allocation5 + $0x370] sm:$0xff]
        %v341 = vld [vmem:[#allocation5 + $0x378] sm:$0xff]
        %v342 = vld [vmem:[#allocation5 + $0x380] sm:$0xff]
        %v343 = vld [vmem:[#allocation5 + $0x388] sm:$0xff]
        %v344 = vld [vmem:[#allocation5 + $0x390] sm:$0xff]
        %v345 = vld [vmem:[#allocation5 + $0x398] sm:$0xff]
        %v346 = vld [vmem:[#allocation5 + $0x3a0] sm:$0xff]
        %v347 = vld [vmem:[#allocation5 + $0x3a8] sm:$0xff]
        %v348 = vld [vmem:[#allocation5 + $0x3b0] sm:$0xff]
        %v349 = vld [vmem:[#allocation5 + $0x3b8] sm:$0xff]
        %v350 = vld [vmem:[#allocation5 + $0x3c0] sm:$0xff]
        %v351 = vld [vmem:[#allocation5 + $0x3c8] sm:$0xff]
        %v352 = vld [vmem:[#allocation5 + $0x3d0] sm:$0xff]
        %v353 = vld [vmem:[#allocation5 + $0x3d8] sm:$0xff]
        %v354 = vld [vmem:[#allocation5 + $0x3e0] sm:$0xff]
        %v355 = vld [vmem:[#allocation5 + $0x3e8] sm:$0xff]
        %v356 = vld [vmem:[#allocation5 + $0x3f0] sm:$0xff]
        %v357 = vld [vmem:[#allocation5 + $0x3f8] sm:$0xff]
        %v358 = vld [vmem:[#allocation5 + $0x400] sm:$0xff]
        %v359 = vld [vmem:[#allocation5 + $0x408] sm:$0xff]
        %v360 = vld [vmem:[#allocation5 + $0x410] sm:$0xff]
        %v361 = vld [vmem:[#allocation5 + $0x418] sm:$0xff]
        %v362 = vld [vmem:[#allocation5 + $0x420] sm:$0xff]
        %v363 = vld [vmem:[#allocation5 + $0x428] sm:$0xff]
        %v364 = vld [vmem:[#allocation5 + $0x430] sm:$0xff]
        %v365 = vld [vmem:[#allocation5 + $0x438] sm:$0xff]
        %v366 = vld [vmem:[#allocation5 + $0x440] sm:$0xff]
        %v367 = vld [vmem:[#allocation5 + $0x448] sm:$0xff]
        %v368 = vld [vmem:[#allocation5 + $0x450] sm:$0xff]
        %v369 = vld [vmem:[#allocation5 + $0x458] sm:$0xff]
        %v370 = vld [vmem:[#allocation5 + $0x460] sm:$0xff]
        %v371 = vld [vmem:[#allocation5 + $0x468] sm:$0xff]
        %v372 = vld [vmem:[#allocation5 + $0x470] sm:$0xff]
        %v373 = vld [vmem:[#allocation5 + $0x478] sm:$0xff]
        %v374 = vld [vmem:[#allocation5 + $0x480] sm:$0xff]
        %v375 = vld [vmem:[#allocation5 + $0x488] sm:$0xff]
        %v376 = vld [vmem:[#allocation5 + $0x490] sm:$0xff]
        %v377 = vld [vmem:[#allocation5 + $0x498] sm:$0xff]
        %v378 = vld [vmem:[#allocation5 + $0x4a0] sm:$0xff]
        %v379 = vld [vmem:[#allocation5 + $0x4a8] sm:$0xff]
        %v380 = vld [vmem:[#allocation5 + $0x4b0] sm:$0xff]
        %v381 = vld [vmem:[#allocation5 + $0x4b8] sm:$0xff]
        %v382 = vld [vmem:[#allocation5 + $0x4c0] sm:$0xff]
        %v383 = vld [vmem:[#allocation5 + $0x4c8] sm:$0xff]
        %v384 = vld [vmem:[#allocation5 + $0x4d0] sm:$0xff]
        %v385 = vld [vmem:[#allocation5 + $0x4d8] sm:$0xff]
        %v386 = vld [vmem:[#allocation5 + $0x4e0] sm:$0xff]
        %v387 = vld [vmem:[#allocation5 + $0x4e8] sm:$0xff]
        %v388 = vld [vmem:[#allocation5 + $0x4f0] sm:$0xff]
        %v389 = vld [vmem:[#allocation5 + $0x4f8] sm:$0xff]
        %v390 = vld [vmem:[#allocation5 + $0x500] sm:$0xff]
        %v391 = vld [vmem:[#allocation5 + $0x508] sm:$0xff]
        %v392 = vld [vmem:[#allocation5 + $0x510] sm:$0xff]
        %v393 = vld [vmem:[#allocation5 + $0x518] sm:$0xff]
        %v394 = vld [vmem:[#allocation5 + $0x520] sm:$0xff]
        %v395 = vld [vmem:[#allocation5 + $0x528] sm:$0xff]
        %v396 = vld [vmem:[#allocation5 + $0x530] sm:$0xff]
        %v397 = vld [vmem:[#allocation5 + $0x538] sm:$0xff]
        %v398 = vld [vmem:[#allocation5 + $0x540] sm:$0xff]
        %v399 = vld [vmem:[#allocation5 + $0x548] sm:$0xff]
        %v400 = vld [vmem:[#allocation5 + $0x550] sm:$0xff]
        %v401 = vld [vmem:[#allocation5 + $0x558] sm:$0xff]
        %v402 = vld [vmem:[#allocation5 + $0x560] sm:$0xff]
        %v403 = vld [vmem:[#allocation5 + $0x568] sm:$0xff]
        %v404 = vld [vmem:[#allocation5 + $0x570] sm:$0xff]
        %v405 = vld [vmem:[#allocation5 + $0x578] sm:$0xff]
        %v406 = vld [vmem:[#allocation5 + $0x580] sm:$0xff]
        %v407 = vld [vmem:[#allocation5 + $0x588] sm:$0xff]
        %v408 = vld [vmem:[#allocation5 + $0x590] sm:$0xff]
        %v409 = vld [vmem:[#allocation5 + $0x598] sm:$0xff]
        %v410 = vld [vmem:[#allocation5 + $0x5a0] sm:$0xff]
        %v411 = vld [vmem:[#allocation5 + $0x5a8] sm:$0xff]
        %v412 = vld [vmem:[#allocation5 + $0x5b0] sm:$0xff]
        %v413 = vld [vmem:[#allocation5 + $0x5b8] sm:$0xff]
        %v414 = vld [vmem:[#allocation5 + $0x5c0] sm:$0xff]
        %v415 = vld [vmem:[#allocation5 + $0x5c8] sm:$0xff]
        %v416 = vld [vmem:[#allocation5 + $0x5d0] sm:$0xff]
        %v417 = vld [vmem:[#allocation5 + $0x5d8] sm:$0xff]
        %v418 = vld [vmem:[#allocation5 + $0x5e0] sm:$0xff]
        %v419 = vld [vmem:[#allocation5 + $0x5e8] sm:$0xff]
        %v420 = vld [vmem:[#allocation5 + $0x5f0] sm:$0xff]
        %v421 = vld [vmem:[#allocation5 + $0x5f8] sm:$0xff]
        %v614 = vunpack.c.l.b16 %v230
        %v615 = vunpack.c.h.b16 %v230
        %v616 = vunpack.c.l.b16 %v231
        %v617 = vunpack.c.h.b16 %v231
        %v618 = vunpack.c.l.b16 %v232
        %v619 = vunpack.c.h.b16 %v232
        %v620 = vunpack.c.l.b16 %v233
        %v621 = vunpack.c.h.b16 %v233
        %v622 = vunpack.c.l.b16 %v234
        %v623 = vunpack.c.h.b16 %v234
        %v624 = vunpack.c.l.b16 %v235
        %v625 = vunpack.c.h.b16 %v235
        %v626 = vunpack.c.l.b16 %v236
        %v627 = vunpack.c.h.b16 %v236
        %v628 = vunpack.c.l.b16 %v237
        %v629 = vunpack.c.h.b16 %v237
        %v630 = vunpack.c.l.b16 %v238
        %v631 = vunpack.c.h.b16 %v238
        %v632 = vunpack.c.l.b16 %v239
        %v633 = vunpack.c.h.b16 %v239
        %v634 = vunpack.c.l.b16 %v240
        %v635 = vunpack.c.h.b16 %v240
        %v636 = vunpack.c.l.b16 %v241
        %v637 = vunpack.c.h.b16 %v241
        %v638 = vunpack.c.l.b16 %v242
        %v639 = vunpack.c.h.b16 %v242
        %v640 = vunpack.c.l.b16 %v243
        %v641 = vunpack.c.h.b16 %v243
        %v642 = vunpack.c.l.b16 %v244
        %v643 = vunpack.c.h.b16 %v244
        %v644 = vunpack.c.l.b16 %v245
        %v645 = vunpack.c.h.b16 %v245
        %v646 = vunpack.c.l.b16 %v246
        %v647 = vunpack.c.h.b16 %v246
        %v648 = vunpack.c.l.b16 %v247
        %v649 = vunpack.c.h.b16 %v247
        %v650 = vunpack.c.l.b16 %v248
        %v651 = vunpack.c.h.b16 %v248
        %v652 = vunpack.c.l.b16 %v249
        %v653 = vunpack.c.h.b16 %v249
        %v654 = vunpack.c.l.b16 %v250
        %v655 = vunpack.c.h.b16 %v250
        %v656 = vunpack.c.l.b16 %v251
        %v657 = vunpack.c.h.b16 %v251
        %v658 = vunpack.c.l.b16 %v252
        %v659 = vunpack.c.h.b16 %v252
        %v660 = vunpack.c.l.b16 %v253
        %v661 = vunpack.c.h.b16 %v253
        %v662 = vunpack.c.l.b16 %v254
        %v663 = vunpack.c.h.b16 %v254
        %v664 = vunpack.c.l.b16 %v255
        %v665 = vunpack.c.h.b16 %v255
        %v666 = vunpack.c.l.b16 %v256
        %v667 = vunpack.c.h.b16 %v256
        %v668 = vunpack.c.l.b16 %v257
        %v669 = vunpack.c.h.b16 %v257
        %v670 = vunpack.c.l.b16 %v258
        %v671 = vunpack.c.h.b16 %v258
        %v672 = vunpack.c.l.b16 %v259
        %v673 = vunpack.c.h.b16 %v259
        %v674 = vunpack.c.l.b16 %v260
        %v675 = vunpack.c.h.b16 %v260
        %v676 = vunpack.c.l.b16 %v261
        %v677 = vunpack.c.h.b16 %v261
        %v678 = vunpack.c.l.b16 %v262
        %v679 = vunpack.c.h.b16 %v262
        %v680 = vunpack.c.l.b16 %v263
        %v681 = vunpack.c.h.b16 %v263
        %v682 = vunpack.c.l.b16 %v264
        %v683 = vunpack.c.h.b16 %v264
        %v684 = vunpack.c.l.b16 %v265
        %v685 = vunpack.c.h.b16 %v265
        %v686 = vunpack.c.l.b16 %v266
        %v687 = vunpack.c.h.b16 %v266
        %v688 = vunpack.c.l.b16 %v267
        %v689 = vunpack.c.h.b16 %v267
        %v690 = vunpack.c.l.b16 %v268
        %v691 = vunpack.c.h.b16 %v268
        %v692 = vunpack.c.l.b16 %v269
        %v693 = vunpack.c.h.b16 %v269
        %v694 = vunpack.c.l.b16 %v270
        %v695 = vunpack.c.h.b16 %v270
        %v696 = vunpack.c.l.b16 %v271
        %v697 = vunpack.c.h.b16 %v271
        %v698 = vunpack.c.l.b16 %v272
        %v699 = vunpack.c.h.b16 %v272
        %v700 = vunpack.c.l.b16 %v273
        %v701 = vunpack.c.h.b16 %v273
        %v702 = vunpack.c.l.b16 %v274
        %v703 = vunpack.c.h.b16 %v274
        %v704 = vunpack.c.l.b16 %v275
        %v705 = vunpack.c.h.b16 %v275
        %v706 = vunpack.c.l.b16 %v276
        %v707 = vunpack.c.h.b16 %v276
        %v708 = vunpack.c.l.b16 %v277
        %v709 = vunpack.c.h.b16 %v277
        %v710 = vunpack.c.l.b16 %v278
        %v711 = vunpack.c.h.b16 %v278
        %v712 = vunpack.c.l.b16 %v279
        %v713 = vunpack.c.h.b16 %v279
        %v714 = vunpack.c.l.b16 %v280
        %v715 = vunpack.c.h.b16 %v280
        %v716 = vunpack.c.l.b16 %v281
        %v717 = vunpack.c.h.b16 %v281
        %v718 = vunpack.c.l.b16 %v282
        %v719 = vunpack.c.h.b16 %v282
        %v720 = vunpack.c.l.b16 %v283
        %v721 = vunpack.c.h.b16 %v283
        %v722 = vunpack.c.l.b16 %v284
        %v723 = vunpack.c.h.b16 %v284
        %v724 = vunpack.c.l.b16 %v285
        %v725 = vunpack.c.h.b16 %v285
        %v726 = vunpack.c.l.b16 %v286
        %v727 = vunpack.c.h.b16 %v286
        %v728 = vunpack.c.l.b16 %v287
        %v729 = vunpack.c.h.b16 %v287
        %v730 = vunpack.c.l.b16 %v288
        %v731 = vunpack.c.h.b16 %v288
        %v732 = vunpack.c.l.b16 %v289
        %v733 = vunpack.c.h.b16 %v289
        %v734 = vunpack.c.l.b16 %v290
        %v735 = vunpack.c.h.b16 %v290
        %v736 = vunpack.c.l.b16 %v291
        %v737 = vunpack.c.h.b16 %v291
        %v738 = vunpack.c.l.b16 %v292
        %v739 = vunpack.c.h.b16 %v292
        %v740 = vunpack.c.l.b16 %v293
        %v741 = vunpack.c.h.b16 %v293
        %v742 = vunpack.c.l.b16 %v294
        %v743 = vunpack.c.h.b16 %v294
        %v744 = vunpack.c.l.b16 %v295
        %v745 = vunpack.c.h.b16 %v295
        %v746 = vunpack.c.l.b16 %v296
        %v747 = vunpack.c.h.b16 %v296
        %v748 = vunpack.c.l.b16 %v297
        %v749 = vunpack.c.h.b16 %v297
        %v750 = vunpack.c.l.b16 %v298
        %v751 = vunpack.c.h.b16 %v298
        %v752 = vunpack.c.l.b16 %v299
        %v753 = vunpack.c.h.b16 %v299
        %v754 = vunpack.c.l.b16 %v300
        %v755 = vunpack.c.h.b16 %v300
        %v756 = vunpack.c.l.b16 %v301
        %v757 = vunpack.c.h.b16 %v301
        %v758 = vunpack.c.l.b16 %v302
        %v759 = vunpack.c.h.b16 %v302
        %v760 = vunpack.c.l.b16 %v303
        %v761 = vunpack.c.h.b16 %v303
        %v762 = vunpack.c.l.b16 %v304
        %v763 = vunpack.c.h.b16 %v304
        %v764 = vunpack.c.l.b16 %v305
        %v765 = vunpack.c.h.b16 %v305
        %v766 = vunpack.c.l.b16 %v306
        %v767 = vunpack.c.h.b16 %v306
        %v768 = vunpack.c.l.b16 %v307
        %v769 = vunpack.c.h.b16 %v307
        %v770 = vunpack.c.l.b16 %v308
        %v771 = vunpack.c.h.b16 %v308
        %v772 = vunpack.c.l.b16 %v309
        %v773 = vunpack.c.h.b16 %v309
        %v774 = vunpack.c.l.b16 %v310
        %v775 = vunpack.c.h.b16 %v310
        %v776 = vunpack.c.l.b16 %v311
        %v777 = vunpack.c.h.b16 %v311
        %v778 = vunpack.c.l.b16 %v312
        %v779 = vunpack.c.h.b16 %v312
        %v780 = vunpack.c.l.b16 %v313
        %v781 = vunpack.c.h.b16 %v313
        %v782 = vunpack.c.l.b16 %v314
        %v783 = vunpack.c.h.b16 %v314
        %v784 = vunpack.c.l.b16 %v315
        %v785 = vunpack.c.h.b16 %v315
        %v786 = vunpack.c.l.b16 %v316
        %v787 = vunpack.c.h.b16 %v316
        %v788 = vunpack.c.l.b16 %v317
        %v789 = vunpack.c.h.b16 %v317
        %v790 = vunpack.c.l.b16 %v318
        %v791 = vunpack.c.h.b16 %v318
        %v792 = vunpack.c.l.b16 %v319
        %v793 = vunpack.c.h.b16 %v319
        %v794 = vunpack.c.l.b16 %v320
        %v795 = vunpack.c.h.b16 %v320
        %v796 = vunpack.c.l.b16 %v321
        %v797 = vunpack.c.h.b16 %v321
        %v798 = vunpack.c.l.b16 %v322
        %v799 = vunpack.c.h.b16 %v322
        %v800 = vunpack.c.l.b16 %v323
        %v801 = vunpack.c.h.b16 %v323
        %v802 = vunpack.c.l.b16 %v324
        %v803 = vunpack.c.h.b16 %v324
        %v804 = vunpack.c.l.b16 %v325
        %v805 = vunpack.c.h.b16 %v325
        %v806 = vunpack.c.l.b16 %v326
        %v807 = vunpack.c.h.b16 %v326
        %v808 = vunpack.c.l.b16 %v327
        %v809 = vunpack.c.h.b16 %v327
        %v810 = vunpack.c.l.b16 %v328
        %v811 = vunpack.c.h.b16 %v328
        %v812 = vunpack.c.l.b16 %v329
        %v813 = vunpack.c.h.b16 %v329
        %v814 = vunpack.c.l.b16 %v330
        %v815 = vunpack.c.h.b16 %v330
        %v816 = vunpack.c.l.b16 %v331
        %v817 = vunpack.c.h.b16 %v331
        %v818 = vunpack.c.l.b16 %v332
        %v819 = vunpack.c.h.b16 %v332
        %v820 = vunpack.c.l.b16 %v333
        %v821 = vunpack.c.h.b16 %v333
        %v822 = vunpack.c.l.b16 %v334
        %v823 = vunpack.c.h.b16 %v334
        %v824 = vunpack.c.l.b16 %v335
        %v825 = vunpack.c.h.b16 %v335
        %v826 = vunpack.c.l.b16 %v336
        %v827 = vunpack.c.h.b16 %v336
        %v828 = vunpack.c.l.b16 %v337
        %v829 = vunpack.c.h.b16 %v337
        %v830 = vunpack.c.l.b16 %v338
        %v831 = vunpack.c.h.b16 %v338
        %v832 = vunpack.c.l.b16 %v339
        %v833 = vunpack.c.h.b16 %v339
        %v834 = vunpack.c.l.b16 %v340
        %v835 = vunpack.c.h.b16 %v340
        %v836 = vunpack.c.l.b16 %v341
        %v837 = vunpack.c.h.b16 %v341
        %v838 = vunpack.c.l.b16 %v342
        %v839 = vunpack.c.h.b16 %v342
        %v840 = vunpack.c.l.b16 %v343
        %v841 = vunpack.c.h.b16 %v343
        %v842 = vunpack.c.l.b16 %v344
        %v843 = vunpack.c.h.b16 %v344
        %v844 = vunpack.c.l.b16 %v345
        %v845 = vunpack.c.h.b16 %v345
        %v846 = vunpack.c.l.b16 %v346
        %v847 = vunpack.c.h.b16 %v346
        %v848 = vunpack.c.l.b16 %v347
        %v849 = vunpack.c.h.b16 %v347
        %v850 = vunpack.c.l.b16 %v348
        %v851 = vunpack.c.h.b16 %v348
        %v852 = vunpack.c.l.b16 %v349
        %v853 = vunpack.c.h.b16 %v349
        %v854 = vunpack.c.l.b16 %v350
        %v855 = vunpack.c.h.b16 %v350
        %v856 = vunpack.c.l.b16 %v351
        %v857 = vunpack.c.h.b16 %v351
        %v858 = vunpack.c.l.b16 %v352
        %v859 = vunpack.c.h.b16 %v352
        %v860 = vunpack.c.l.b16 %v353
        %v861 = vunpack.c.h.b16 %v353
        %v862 = vunpack.c.l.b16 %v354
        %v863 = vunpack.c.h.b16 %v354
        %v864 = vunpack.c.l.b16 %v355
        %v865 = vunpack.c.h.b16 %v355
        %v866 = vunpack.c.l.b16 %v356
        %v867 = vunpack.c.h.b16 %v356
        %v868 = vunpack.c.l.b16 %v357
        %v869 = vunpack.c.h.b16 %v357
        %v870 = vunpack.c.l.b16 %v358
        %v871 = vunpack.c.h.b16 %v358
        %v872 = vunpack.c.l.b16 %v359
        %v873 = vunpack.c.h.b16 %v359
        %v874 = vunpack.c.l.b16 %v360
        %v875 = vunpack.c.h.b16 %v360
        %v876 = vunpack.c.l.b16 %v361
        %v877 = vunpack.c.h.b16 %v361
        %v878 = vunpack.c.l.b16 %v362
        %v879 = vunpack.c.h.b16 %v362
        %v880 = vunpack.c.l.b16 %v363
        %v881 = vunpack.c.h.b16 %v363
        %v882 = vunpack.c.l.b16 %v364
        %v883 = vunpack.c.h.b16 %v364
        %v884 = vunpack.c.l.b16 %v365
        %v885 = vunpack.c.h.b16 %v365
        %v886 = vunpack.c.l.b16 %v366
        %v887 = vunpack.c.h.b16 %v366
        %v888 = vunpack.c.l.b16 %v367
        %v889 = vunpack.c.h.b16 %v367
        %v890 = vunpack.c.l.b16 %v368
        %v891 = vunpack.c.h.b16 %v368
        %v892 = vunpack.c.l.b16 %v369
        %v893 = vunpack.c.h.b16 %v369
        %v894 = vunpack.c.l.b16 %v370
        %v895 = vunpack.c.h.b16 %v370
        %v896 = vunpack.c.l.b16 %v371
        %v897 = vunpack.c.h.b16 %v371
        %v898 = vunpack.c.l.b16 %v372
        %v899 = vunpack.c.h.b16 %v372
        %v900 = vunpack.c.l.b16 %v373
        %v901 = vunpack.c.h.b16 %v373
        %v902 = vunpack.c.l.b16 %v374
        %v903 = vunpack.c.h.b16 %v374
        %v904 = vunpack.c.l.b16 %v375
        %v905 = vunpack.c.h.b16 %v375
        %v906 = vunpack.c.l.b16 %v376
        %v907 = vunpack.c.h.b16 %v376
        %v908 = vunpack.c.l.b16 %v377
        %v909 = vunpack.c.h.b16 %v377
        %v910 = vunpack.c.l.b16 %v378
        %v911 = vunpack.c.h.b16 %v378
        %v912 = vunpack.c.l.b16 %v379
        %v913 = vunpack.c.h.b16 %v379
        %v914 = vunpack.c.l.b16 %v380
        %v915 = vunpack.c.h.b16 %v380
        %v916 = vunpack.c.l.b16 %v381
        %v917 = vunpack.c.h.b16 %v381
        %v918 = vunpack.c.l.b16 %v382
        %v919 = vunpack.c.h.b16 %v382
        %v920 = vunpack.c.l.b16 %v383
        %v921 = vunpack.c.h.b16 %v383
        %v922 = vunpack.c.l.b16 %v384
        %v923 = vunpack.c.h.b16 %v384
        %v924 = vunpack.c.l.b16 %v385
        %v925 = vunpack.c.h.b16 %v385
        %v926 = vunpack.c.l.b16 %v386
        %v927 = vunpack.c.h.b16 %v386
        %v928 = vunpack.c.l.b16 %v387
        %v929 = vunpack.c.h.b16 %v387
        %v930 = vunpack.c.l.b16 %v388
        %v931 = vunpack.c.h.b16 %v388
        %v932 = vunpack.c.l.b16 %v389
        %v933 = vunpack.c.h.b16 %v389
        %v934 = vunpack.c.l.b16 %v390
        %v935 = vunpack.c.h.b16 %v390
        %v936 = vunpack.c.l.b16 %v391
        %v937 = vunpack.c.h.b16 %v391
        %v938 = vunpack.c.l.b16 %v392
        %v939 = vunpack.c.h.b16 %v392
        %v940 = vunpack.c.l.b16 %v393
        %v941 = vunpack.c.h.b16 %v393
        %v942 = vunpack.c.l.b16 %v394
        %v943 = vunpack.c.h.b16 %v394
        %v944 = vunpack.c.l.b16 %v395
        %v945 = vunpack.c.h.b16 %v395
        %v946 = vunpack.c.l.b16 %v396
        %v947 = vunpack.c.h.b16 %v396
        %v948 = vunpack.c.l.b16 %v397
        %v949 = vunpack.c.h.b16 %v397
        %v950 = vunpack.c.l.b16 %v398
        %v951 = vunpack.c.h.b16 %v398
        %v952 = vunpack.c.l.b16 %v399
        %v953 = vunpack.c.h.b16 %v399
        %v954 = vunpack.c.l.b16 %v400
        %v955 = vunpack.c.h.b16 %v400
        %v956 = vunpack.c.l.b16 %v401
        %v957 = vunpack.c.h.b16 %v401
        %v958 = vunpack.c.l.b16 %v402
        %v959 = vunpack.c.h.b16 %v402
        %v960 = vunpack.c.l.b16 %v403
        %v961 = vunpack.c.h.b16 %v403
        %v962 = vunpack.c.l.b16 %v404
        %v963 = vunpack.c.h.b16 %v404
        %v964 = vunpack.c.l.b16 %v405
        %v965 = vunpack.c.h.b16 %v405
        %v966 = vunpack.c.l.b16 %v406
        %v967 = vunpack.c.h.b16 %v406
        %v968 = vunpack.c.l.b16 %v407
        %v969 = vunpack.c.h.b16 %v407
        %v970 = vunpack.c.l.b16 %v408
        %v971 = vunpack.c.h.b16 %v408
        %v972 = vunpack.c.l.b16 %v409
        %v973 = vunpack.c.h.b16 %v409
        %v974 = vunpack.c.l.b16 %v410
        %v975 = vunpack.c.h.b16 %v410
        %v976 = vunpack.c.l.b16 %v411
        %v977 = vunpack.c.h.b16 %v411
        %v978 = vunpack.c.l.b16 %v412
        %v979 = vunpack.c.h.b16 %v412
        %v980 = vunpack.c.l.b16 %v413
        %v981 = vunpack.c.h.b16 %v413
        %v982 = vunpack.c.l.b16 %v414
        %v983 = vunpack.c.h.b16 %v414
        %v984 = vunpack.c.l.b16 %v415
        %v985 = vunpack.c.h.b16 %v415
        %v986 = vunpack.c.l.b16 %v416
        %v987 = vunpack.c.h.b16 %v416
        %v988 = vunpack.c.l.b16 %v417
        %v989 = vunpack.c.h.b16 %v417
        %v990 = vunpack.c.l.b16 %v418
        %v991 = vunpack.c.h.b16 %v418
        %v992 = vunpack.c.l.b16 %v419
        %v993 = vunpack.c.h.b16 %v419
        %v994 = vunpack.c.l.b16 %v420
        %v995 = vunpack.c.h.b16 %v420
        %v996 = vunpack.c.l.b16 %v421
        %v997 = vunpack.c.h.b16 %v421
        %v998 = vpack.c.b16 %v622, %v614
        %v999 = vpack.c.b16 %v623, %v615
        %v1000 = vpack.c.b16 %v624, %v616
        %v1001 = vpack.c.b16 %v625, %v617
        %v1002 = vpack.c.b16 %v626, %v618
        %v1003 = vpack.c.b16 %v627, %v619
        %v1004 = vpack.c.b16 %v628, %v620
        %v1005 = vpack.c.b16 %v629, %v621
        %v1006 = vpack.c.b16 %v638, %v630
        %v1007 = vpack.c.b16 %v639, %v631
        %v1008 = vpack.c.b16 %v640, %v632
        %v1009 = vpack.c.b16 %v641, %v633
        %v1010 = vpack.c.b16 %v642, %v634
        %v1011 = vpack.c.b16 %v643, %v635
        %v1012 = vpack.c.b16 %v644, %v636
        %v1013 = vpack.c.b16 %v645, %v637
        %v1014 = vpack.c.b16 %v654, %v646
        %v1015 = vpack.c.b16 %v655, %v647
        %v1016 = vpack.c.b16 %v656, %v648
        %v1017 = vpack.c.b16 %v657, %v649
        %v1018 = vpack.c.b16 %v658, %v650
        %v1019 = vpack.c.b16 %v659, %v651
        %v1020 = vpack.c.b16 %v660, %v652
        %v1021 = vpack.c.b16 %v661, %v653
        %v1022 = vpack.c.b16 %v670, %v662
        %v1023 = vpack.c.b16 %v671, %v663
        %v1024 = vpack.c.b16 %v672, %v664
        %v1025 = vpack.c.b16 %v673, %v665
        %v1026 = vpack.c.b16 %v674, %v666
        %v1027 = vpack.c.b16 %v675, %v667
        %v1028 = vpack.c.b16 %v676, %v668
        %v1029 = vpack.c.b16 %v677, %v669
        %v1030 = vpack.c.b16 %v686, %v678
        %v1031 = vpack.c.b16 %v687, %v679
        %v1032 = vpack.c.b16 %v688, %v680
        %v1033 = vpack.c.b16 %v689, %v681
        %v1034 = vpack.c.b16 %v690, %v682
        %v1035 = vpack.c.b16 %v691, %v683
        %v1036 = vpack.c.b16 %v692, %v684
        %v1037 = vpack.c.b16 %v693, %v685
        %v1038 = vpack.c.b16 %v702, %v694
        %v1039 = vpack.c.b16 %v703, %v695
        %v1040 = vpack.c.b16 %v704, %v696
        %v1041 = vpack.c.b16 %v705, %v697
        %v1042 = vpack.c.b16 %v706, %v698
        %v1043 = vpack.c.b16 %v707, %v699
        %v1044 = vpack.c.b16 %v708, %v700
        %v1045 = vpack.c.b16 %v709, %v701
        %v1046 = vpack.c.b16 %v718, %v710
        %v1047 = vpack.c.b16 %v719, %v711
        %v1048 = vpack.c.b16 %v720, %v712
        %v1049 = vpack.c.b16 %v721, %v713
        %v1050 = vpack.c.b16 %v722, %v714
        %v1051 = vpack.c.b16 %v723, %v715
        %v1052 = vpack.c.b16 %v724, %v716
        %v1053 = vpack.c.b16 %v725, %v717
        %v1054 = vpack.c.b16 %v734, %v726
        %v1055 = vpack.c.b16 %v735, %v727
        %v1056 = vpack.c.b16 %v736, %v728
        %v1057 = vpack.c.b16 %v737, %v729
        %v1058 = vpack.c.b16 %v738, %v730
        %v1059 = vpack.c.b16 %v739, %v731
        %v1060 = vpack.c.b16 %v740, %v732
        %v1061 = vpack.c.b16 %v741, %v733
        %v1062 = vpack.c.b16 %v750, %v742
        %v1063 = vpack.c.b16 %v751, %v743
        %v1064 = vpack.c.b16 %v752, %v744
        %v1065 = vpack.c.b16 %v753, %v745
        %v1066 = vpack.c.b16 %v754, %v746
        %v1067 = vpack.c.b16 %v755, %v747
        %v1068 = vpack.c.b16 %v756, %v748
        %v1069 = vpack.c.b16 %v757, %v749
        %v1070 = vpack.c.b16 %v766, %v758
        %v1071 = vpack.c.b16 %v767, %v759
        %v1072 = vpack.c.b16 %v768, %v760
        %v1073 = vpack.c.b16 %v769, %v761
        %v1074 = vpack.c.b16 %v770, %v762
        %v1075 = vpack.c.b16 %v771, %v763
        %v1076 = vpack.c.b16 %v772, %v764
        %v1077 = vpack.c.b16 %v773, %v765
        %v1078 = vpack.c.b16 %v782, %v774
        %v1079 = vpack.c.b16 %v783, %v775
        %v1080 = vpack.c.b16 %v784, %v776
        %v1081 = vpack.c.b16 %v785, %v777
        %v1082 = vpack.c.b16 %v786, %v778
        %v1083 = vpack.c.b16 %v787, %v779
        %v1084 = vpack.c.b16 %v788, %v780
        %v1085 = vpack.c.b16 %v789, %v781
        %v1086 = vpack.c.b16 %v798, %v790
        %v1087 = vpack.c.b16 %v799, %v791
        %v1088 = vpack.c.b16 %v800, %v792
        %v1089 = vpack.c.b16 %v801, %v793
        %v1090 = vpack.c.b16 %v802, %v794
        %v1091 = vpack.c.b16 %v803, %v795
        %v1092 = vpack.c.b16 %v804, %v796
        %v1093 = vpack.c.b16 %v805, %v797
        %v1094 = vpack.c.b16 %v814, %v806
        %v1095 = vpack.c.b16 %v815, %v807
        %v1096 = vpack.c.b16 %v816, %v808
        %v1097 = vpack.c.b16 %v817, %v809
        %v1098 = vpack.c.b16 %v818, %v810
        %v1099 = vpack.c.b16 %v819, %v811
        %v1100 = vpack.c.b16 %v820, %v812
        %v1101 = vpack.c.b16 %v821, %v813
        %v1102 = vpack.c.b16 %v830, %v822
        %v1103 = vpack.c.b16 %v831, %v823
        %v1104 = vpack.c.b16 %v832, %v824
        %v1105 = vpack.c.b16 %v833, %v825
        %v1106 = vpack.c.b16 %v834, %v826
        %v1107 = vpack.c.b16 %v835, %v827
        %v1108 = vpack.c.b16 %v836, %v828
        %v1109 = vpack.c.b16 %v837, %v829
        %v1110 = vpack.c.b16 %v846, %v838
        %v1111 = vpack.c.b16 %v847, %v839
        %v1112 = vpack.c.b16 %v848, %v840
        %v1113 = vpack.c.b16 %v849, %v841
        %v1114 = vpack.c.b16 %v850, %v842
        %v1115 = vpack.c.b16 %v851, %v843
        %v1116 = vpack.c.b16 %v852, %v844
        %v1117 = vpack.c.b16 %v853, %v845
        %v1118 = vpack.c.b16 %v862, %v854
        %v1119 = vpack.c.b16 %v863, %v855
        %v1120 = vpack.c.b16 %v864, %v856
        %v1121 = vpack.c.b16 %v865, %v857
        %v1122 = vpack.c.b16 %v866, %v858
        %v1123 = vpack.c.b16 %v867, %v859
        %v1124 = vpack.c.b16 %v868, %v860
        %v1125 = vpack.c.b16 %v869, %v861
        %v1126 = vpack.c.b16 %v878, %v870
        %v1127 = vpack.c.b16 %v879, %v871
        %v1128 = vpack.c.b16 %v880, %v872
        %v1129 = vpack.c.b16 %v881, %v873
        %v1130 = vpack.c.b16 %v882, %v874
        %v1131 = vpack.c.b16 %v883, %v875
        %v1132 = vpack.c.b16 %v884, %v876
        %v1133 = vpack.c.b16 %v885, %v877
        %v1134 = vpack.c.b16 %v894, %v886
        %v1135 = vpack.c.b16 %v895, %v887
        %v1136 = vpack.c.b16 %v896, %v888
        %v1137 = vpack.c.b16 %v897, %v889
        %v1138 = vpack.c.b16 %v898, %v890
        %v1139 = vpack.c.b16 %v899, %v891
        %v1140 = vpack.c.b16 %v900, %v892
        %v1141 = vpack.c.b16 %v901, %v893
        %v1142 = vpack.c.b16 %v910, %v902
        %v1143 = vpack.c.b16 %v911, %v903
        %v1144 = vpack.c.b16 %v912, %v904
        %v1145 = vpack.c.b16 %v913, %v905
        %v1146 = vpack.c.b16 %v914, %v906
        %v1147 = vpack.c.b16 %v915, %v907
        %v1148 = vpack.c.b16 %v916, %v908
        %v1149 = vpack.c.b16 %v917, %v909
        %v1150 = vpack.c.b16 %v926, %v918
        %v1151 = vpack.c.b16 %v927, %v919
        %v1152 = vpack.c.b16 %v928, %v920
        %v1153 = vpack.c.b16 %v929, %v921
        %v1154 = vpack.c.b16 %v930, %v922
        %v1155 = vpack.c.b16 %v931, %v923
        %v1156 = vpack.c.b16 %v932, %v924
        %v1157 = vpack.c.b16 %v933, %v925
        %v1158 = vpack.c.b16 %v942, %v934
        %v1159 = vpack.c.b16 %v943, %v935
        %v1160 = vpack.c.b16 %v944, %v936
        %v1161 = vpack.c.b16 %v945, %v937
        %v1162 = vpack.c.b16 %v946, %v938
        %v1163 = vpack.c.b16 %v947, %v939
        %v1164 = vpack.c.b16 %v948, %v940
        %v1165 = vpack.c.b16 %v949, %v941
        %v1166 = vpack.c.b16 %v958, %v950
        %v1167 = vpack.c.b16 %v959, %v951
        %v1168 = vpack.c.b16 %v960, %v952
        %v1169 = vpack.c.b16 %v961, %v953
        %v1170 = vpack.c.b16 %v962, %v954
        %v1171 = vpack.c.b16 %v963, %v955
        %v1172 = vpack.c.b16 %v964, %v956
        %v1173 = vpack.c.b16 %v965, %v957
        %v1174 = vpack.c.b16 %v974, %v966
        %v1175 = vpack.c.b16 %v975, %v967
        %v1176 = vpack.c.b16 %v976, %v968
        %v1177 = vpack.c.b16 %v977, %v969
        %v1178 = vpack.c.b16 %v978, %v970
        %v1179 = vpack.c.b16 %v979, %v971
        %v1180 = vpack.c.b16 %v980, %v972
        %v1181 = vpack.c.b16 %v981, %v973
        %v1182 = vpack.c.b16 %v990, %v982
        %v1183 = vpack.c.b16 %v991, %v983
        %v1184 = vpack.c.b16 %v992, %v984
        %v1185 = vpack.c.b16 %v993, %v985
        %v1186 = vpack.c.b16 %v994, %v986
        %v1187 = vpack.c.b16 %v995, %v987
        %v1188 = vpack.c.b16 %v996, %v988
        %v1189 = vpack.c.b16 %v997, %v989
        %1382 = vmatpush.bf16.msra.mxu0 %v1054
        %1383 = vmatpush.bf16.msra.mxu0 %v1046
        %1384 = vmatpush.bf16.msra.mxu0 %v1038
        %1385 = vmatpush.bf16.msra.mxu0 %v1030
        %1386 = vmatpush.bf16.msra.mxu0 %v1022
        %1387 = vmatpush.bf16.msra.mxu0 %v1014
        %1388 = vmatpush.bf16.msra.mxu0 %v1006
        %1389 = vmatpush.bf16.msra.mxu0 %v998
        %1390 = vmatmul.bf16.gmra.mxu0 %v223
        %v1391 = vpop.f32.mrf.mxu0
        %v1392 = vadd.f32 0.0, %v1391
        %v1393 = vpop.f32.mrf.mxu0
        %1394 = vdwg.mxu0
        %1395 = vmatpush.bf16.msra.mxu0 %v1118
        %1396 = vmatpush.bf16.msra.mxu0 %v1110
        %1397 = vmatpush.bf16.msra.mxu0 %v1102
        %1398 = vmatpush.bf16.msra.mxu0 %v1094
        %1399 = vmatpush.bf16.msra.mxu0 %v1086
        %1400 = vmatpush.bf16.msra.mxu0 %v1078
        %1401 = vmatpush.bf16.msra.mxu0 %v1070
        %1402 = vmatpush.bf16.msra.mxu0 %v1062
        %1403 = vmatmul.bf16.gmra.mxu0 %v226
        %v1404 = vpop.f32.mrf.mxu0
        %v1405 = vadd.f32 %v1392, %v1404
        %v1406 = vpop.f32.mrf.mxu0
        %1407 = vdwg.mxu0
        %1408 = vmatpush.bf16.msra.mxu0 %v1182
        %1409 = vmatpush.bf16.msra.mxu0 %v1174
        %1410 = vmatpush.bf16.msra.mxu0 %v1166
        %1411 = vmatpush.bf16.msra.mxu0 %v1158
        %1412 = vmatpush.bf16.msra.mxu0 %v1150
        %1413 = vmatpush.bf16.msra.mxu0 %v1142
        %1414 = vmatpush.bf16.msra.mxu0 %v1134
        %1415 = vmatpush.bf16.msra.mxu0 %v1126
        %1416 = vmatmul.bf16.gmra.mxu0 %v229
        %v1417 = vpop.f32.mrf.mxu0
        %v1418 = vadd.f32 %v1405, %v1417
        %v1419 = vpop.f32.mrf.mxu0
        %1420 = vdwg.mxu0
        %1421 = vmatpush.bf16.msra.mxu0 %v1055
        %1422 = vmatpush.bf16.msra.mxu0 %v1047
        %1423 = vmatpush.bf16.msra.mxu0 %v1039
        %1424 = vmatpush.bf16.msra.mxu0 %v1031
        %1425 = vmatpush.bf16.msra.mxu0 %v1023
        %1426 = vmatpush.bf16.msra.mxu0 %v1015
        %1427 = vmatpush.bf16.msra.mxu0 %v1007
        %1428 = vmatpush.bf16.msra.mxu0 %v999
        %1429 = vmatmul.bf16.gmra.mxu0 %v223
        %v1430 = vpop.f32.mrf.mxu0
        %v1431 = vadd.f32 0.0, %v1430
        %v1432 = vpop.f32.mrf.mxu0
        %1433 = vdwg.mxu0
        %1434 = vmatpush.bf16.msra.mxu0 %v1119
        %1435 = vmatpush.bf16.msra.mxu0 %v1111
        %1436 = vmatpush.bf16.msra.mxu0 %v1103
        %1437 = vmatpush.bf16.msra.mxu0 %v1095
        %1438 = vmatpush.bf16.msra.mxu0 %v1087
        %1439 = vmatpush.bf16.msra.mxu0 %v1079
        %1440 = vmatpush.bf16.msra.mxu0 %v1071
        %1441 = vmatpush.bf16.msra.mxu0 %v1063
        %1442 = vmatmul.bf16.gmra.mxu0 %v226
        %v1443 = vpop.f32.mrf.mxu0
        %v1444 = vadd.f32 %v1431, %v1443
        %v1445 = vpop.f32.mrf.mxu0
        %1446 = vdwg.mxu0
        %1447 = vmatpush.bf16.msra.mxu0 %v1183
        %1448 = vmatpush.bf16.msra.mxu0 %v1175
        %1449 = vmatpush.bf16.msra.mxu0 %v1167
        %1450 = vmatpush.bf16.msra.mxu0 %v1159
        %1451 = vmatpush.bf16.msra.mxu0 %v1151
        %1452 = vmatpush.bf16.msra.mxu0 %v1143
        %1453 = vmatpush.bf16.msra.mxu0 %v1135
        %1454 = vmatpush.bf16.msra.mxu0 %v1127
        %1455 = vmatmul.bf16.gmra.mxu0 %v229
        %v1456 = vpop.f32.mrf.mxu0
        %v1457 = vadd.f32 %v1444, %v1456
        %v1458 = vpop.f32.mrf.mxu0
        %1459 = vdwg.mxu0
        %1460 = vmatpush.bf16.msra.mxu0 %v1056
        %1461 = vmatpush.bf16.msra.mxu0 %v1048
        %1462 = vmatpush.bf16.msra.mxu0 %v1040
        %1463 = vmatpush.bf16.msra.mxu0 %v1032
        %1464 = vmatpush.bf16.msra.mxu0 %v1024
        %1465 = vmatpush.bf16.msra.mxu0 %v1016
        %1466 = vmatpush.bf16.msra.mxu0 %v1008
        %1467 = vmatpush.bf16.msra.mxu0 %v1000
        %1468 = vmatmul.bf16.gmra.mxu0 %v223
        %v1469 = vpop.f32.mrf.mxu0
        %v1470 = vadd.f32 0.0, %v1469
        %v1471 = vpop.f32.mrf.mxu0
        %1472 = vdwg.mxu0
        %1473 = vmatpush.bf16.msra.mxu0 %v1120
        %1474 = vmatpush.bf16.msra.mxu0 %v1112
        %1475 = vmatpush.bf16.msra.mxu0 %v1104
        %1476 = vmatpush.bf16.msra.mxu0 %v1096
        %1477 = vmatpush.bf16.msra.mxu0 %v1088
        %1478 = vmatpush.bf16.msra.mxu0 %v1080
        %1479 = vmatpush.bf16.msra.mxu0 %v1072
        %1480 = vmatpush.bf16.msra.mxu0 %v1064
        %1481 = vmatmul.bf16.gmra.mxu0 %v226
        %v1482 = vpop.f32.mrf.mxu0
        %v1483 = vadd.f32 %v1470, %v1482
        %v1484 = vpop.f32.mrf.mxu0
        %1485 = vdwg.mxu0
        %1486 = vmatpush.bf16.msra.mxu0 %v1184
        %1487 = vmatpush.bf16.msra.mxu0 %v1176
        %1488 = vmatpush.bf16.msra.mxu0 %v1168
        %1489 = vmatpush.bf16.msra.mxu0 %v1160
        %1490 = vmatpush.bf16.msra.mxu0 %v1152
        %1491 = vmatpush.bf16.msra.mxu0 %v1144
        %1492 = vmatpush.bf16.msra.mxu0 %v1136
        %1493 = vmatpush.bf16.msra.mxu0 %v1128
        %1494 = vmatmul.bf16.gmra.mxu0 %v229
        %v1495 = vpop.f32.mrf.mxu0
        %v1496 = vadd.f32 %v1483, %v1495
        %v1497 = vpop.f32.mrf.mxu0
        %1498 = vdwg.mxu0
        %1499 = vmatpush.bf16.msra.mxu0 %v1057
        %1500 = vmatpush.bf16.msra.mxu0 %v1049
        %1501 = vmatpush.bf16.msra.mxu0 %v1041
        %1502 = vmatpush.bf16.msra.mxu0 %v1033
        %1503 = vmatpush.bf16.msra.mxu0 %v1025
        %1504 = vmatpush.bf16.msra.mxu0 %v1017
        %1505 = vmatpush.bf16.msra.mxu0 %v1009
        %1506 = vmatpush.bf16.msra.mxu0 %v1001
        %1507 = vmatmul.bf16.gmra.mxu0 %v223
        %v1508 = vpop.f32.mrf.mxu0
        %v1509 = vadd.f32 0.0, %v1508
        %v1510 = vpop.f32.mrf.mxu0
        %1511 = vdwg.mxu0
        %1512 = vmatpush.bf16.msra.mxu0 %v1121
        %1513 = vmatpush.bf16.msra.mxu0 %v1113
        %1514 = vmatpush.bf16.msra.mxu0 %v1105
        %1515 = vmatpush.bf16.msra.mxu0 %v1097
        %1516 = vmatpush.bf16.msra.mxu0 %v1089
        %1517 = vmatpush.bf16.msra.mxu0 %v1081
        %1518 = vmatpush.bf16.msra.mxu0 %v1073
        %1519 = vmatpush.bf16.msra.mxu0 %v1065
        %1520 = vmatmul.bf16.gmra.mxu0 %v226
        %v1521 = vpop.f32.mrf.mxu0
        %v1522 = vadd.f32 %v1509, %v1521
        %v1523 = vpop.f32.mrf.mxu0
        %1524 = vdwg.mxu0
        %1525 = vmatpush.bf16.msra.mxu0 %v1185
        %1526 = vmatpush.bf16.msra.mxu0 %v1177
        %1527 = vmatpush.bf16.msra.mxu0 %v1169
        %1528 = vmatpush.bf16.msra.mxu0 %v1161
        %1529 = vmatpush.bf16.msra.mxu0 %v1153
        %1530 = vmatpush.bf16.msra.mxu0 %v1145
        %1531 = vmatpush.bf16.msra.mxu0 %v1137
        %1532 = vmatpush.bf16.msra.mxu0 %v1129
        %1533 = vmatmul.bf16.gmra.mxu0 %v229
        %v1534 = vpop.f32.mrf.mxu0
        %v1535 = vadd.f32 %v1522, %v1534
        %v1536 = vpop.f32.mrf.mxu0
        %1537 = vdwg.mxu0
        %1538 = vmatpush.bf16.msra.mxu0 %v1058
        %1539 = vmatpush.bf16.msra.mxu0 %v1050
        %1540 = vmatpush.bf16.msra.mxu0 %v1042
        %1541 = vmatpush.bf16.msra.mxu0 %v1034
        %1542 = vmatpush.bf16.msra.mxu0 %v1026
        %1543 = vmatpush.bf16.msra.mxu0 %v1018
        %1544 = vmatpush.bf16.msra.mxu0 %v1010
        %1545 = vmatpush.bf16.msra.mxu0 %v1002
        %1546 = vmatmul.bf16.gmra.mxu0 %v223
        %v1547 = vpop.f32.mrf.mxu0
        %v1548 = vadd.f32 0.0, %v1547
        %v1549 = vpop.f32.mrf.mxu0
        %1550 = vdwg.mxu0
        %1551 = vmatpush.bf16.msra.mxu0 %v1122
        %1552 = vmatpush.bf16.msra.mxu0 %v1114
        %1553 = vmatpush.bf16.msra.mxu0 %v1106
        %1554 = vmatpush.bf16.msra.mxu0 %v1098
        %1555 = vmatpush.bf16.msra.mxu0 %v1090
        %1556 = vmatpush.bf16.msra.mxu0 %v1082
        %1557 = vmatpush.bf16.msra.mxu0 %v1074
        %1558 = vmatpush.bf16.msra.mxu0 %v1066
        %1559 = vmatmul.bf16.gmra.mxu0 %v226
        %v1560 = vpop.f32.mrf.mxu0
        %v1561 = vadd.f32 %v1548, %v1560
        %v1562 = vpop.f32.mrf.mxu0
        %1563 = vdwg.mxu0
        %1564 = vmatpush.bf16.msra.mxu0 %v1186
        %1565 = vmatpush.bf16.msra.mxu0 %v1178
        %1566 = vmatpush.bf16.msra.mxu0 %v1170
        %1567 = vmatpush.bf16.msra.mxu0 %v1162
        %1568 = vmatpush.bf16.msra.mxu0 %v1154
        %1569 = vmatpush.bf16.msra.mxu0 %v1146
        %1570 = vmatpush.bf16.msra.mxu0 %v1138
        %1571 = vmatpush.bf16.msra.mxu0 %v1130
        %1572 = vmatmul.bf16.gmra.mxu0 %v229
        %v1573 = vpop.f32.mrf.mxu0
        %v1574 = vadd.f32 %v1561, %v1573
        %v1575 = vpop.f32.mrf.mxu0
        %1576 = vdwg.mxu0
        %1577 = vmatpush.bf16.msra.mxu0 %v1059
        %1578 = vmatpush.bf16.msra.mxu0 %v1051
        %1579 = vmatpush.bf16.msra.mxu0 %v1043
        %1580 = vmatpush.bf16.msra.mxu0 %v1035
        %1581 = vmatpush.bf16.msra.mxu0 %v1027
        %1582 = vmatpush.bf16.msra.mxu0 %v1019
        %1583 = vmatpush.bf16.msra.mxu0 %v1011
        %1584 = vmatpush.bf16.msra.mxu0 %v1003
        %1585 = vmatmul.bf16.gmra.mxu0 %v223
        %v1586 = vpop.f32.mrf.mxu0
        %v1587 = vadd.f32 0.0, %v1586
        %v1588 = vpop.f32.mrf.mxu0
        %1589 = vdwg.mxu0
        %1590 = vmatpush.bf16.msra.mxu0 %v1123
        %1591 = vmatpush.bf16.msra.mxu0 %v1115
        %1592 = vmatpush.bf16.msra.mxu0 %v1107
        %1593 = vmatpush.bf16.msra.mxu0 %v1099
        %1594 = vmatpush.bf16.msra.mxu0 %v1091
        %1595 = vmatpush.bf16.msra.mxu0 %v1083
        %1596 = vmatpush.bf16.msra.mxu0 %v1075
        %1597 = vmatpush.bf16.msra.mxu0 %v1067
        %1598 = vmatmul.bf16.gmra.mxu0 %v226
        %v1599 = vpop.f32.mrf.mxu0
        %v1600 = vadd.f32 %v1587, %v1599
        %v1601 = vpop.f32.mrf.mxu0
        %1602 = vdwg.mxu0
        %1603 = vmatpush.bf16.msra.mxu0 %v1187
        %1604 = vmatpush.bf16.msra.mxu0 %v1179
        %1605 = vmatpush.bf16.msra.mxu0 %v1171
        %1606 = vmatpush.bf16.msra.mxu0 %v1163
        %1607 = vmatpush.bf16.msra.mxu0 %v1155
        %1608 = vmatpush.bf16.msra.mxu0 %v1147
        %1609 = vmatpush.bf16.msra.mxu0 %v1139
        %1610 = vmatpush.bf16.msra.mxu0 %v1131
        %1611 = vmatmul.bf16.gmra.mxu0 %v229
        %v1612 = vpop.f32.mrf.mxu0
        %v1613 = vadd.f32 %v1600, %v1612
        %v1614 = vpop.f32.mrf.mxu0
        %1615 = vdwg.mxu0
        %1616 = vmatpush.bf16.msra.mxu0 %v1060
        %1617 = vmatpush.bf16.msra.mxu0 %v1052
        %1618 = vmatpush.bf16.msra.mxu0 %v1044
        %1619 = vmatpush.bf16.msra.mxu0 %v1036
        %1620 = vmatpush.bf16.msra.mxu0 %v1028
        %1621 = vmatpush.bf16.msra.mxu0 %v1020
        %1622 = vmatpush.bf16.msra.mxu0 %v1012
        %1623 = vmatpush.bf16.msra.mxu0 %v1004
        %1624 = vmatmul.bf16.gmra.mxu0 %v223
        %v1625 = vpop.f32.mrf.mxu0
        %v1626 = vadd.f32 0.0, %v1625
        %v1627 = vpop.f32.mrf.mxu0
        %1628 = vdwg.mxu0
        %1629 = vmatpush.bf16.msra.mxu0 %v1124
        %1630 = vmatpush.bf16.msra.mxu0 %v1116
        %1631 = vmatpush.bf16.msra.mxu0 %v1108
        %1632 = vmatpush.bf16.msra.mxu0 %v1100
        %1633 = vmatpush.bf16.msra.mxu0 %v1092
        %1634 = vmatpush.bf16.msra.mxu0 %v1084
        %1635 = vmatpush.bf16.msra.mxu0 %v1076
        %1636 = vmatpush.bf16.msra.mxu0 %v1068
        %1637 = vmatmul.bf16.gmra.mxu0 %v226
        %v1638 = vpop.f32.mrf.mxu0
        %v1639 = vadd.f32 %v1626, %v1638
        %v1640 = vpop.f32.mrf.mxu0
        %1641 = vdwg.mxu0
        %1642 = vmatpush.bf16.msra.mxu0 %v1188
        %1643 = vmatpush.bf16.msra.mxu0 %v1180
        %1644 = vmatpush.bf16.msra.mxu0 %v1172
        %1645 = vmatpush.bf16.msra.mxu0 %v1164
        %1646 = vmatpush.bf16.msra.mxu0 %v1156
        %1647 = vmatpush.bf16.msra.mxu0 %v1148
        %1648 = vmatpush.bf16.msra.mxu0 %v1140
        %1649 = vmatpush.bf16.msra.mxu0 %v1132
        %1650 = vmatmul.bf16.gmra.mxu0 %v229
        %v1651 = vpop.f32.mrf.mxu0
        %v1652 = vadd.f32 %v1639, %v1651
        %v1653 = vpop.f32.mrf.mxu0
        %1654 = vdwg.mxu0
        %1655 = vmatpush.bf16.msra.mxu0 %v1061
        %1656 = vmatpush.bf16.msra.mxu0 %v1053
        %1657 = vmatpush.bf16.msra.mxu0 %v1045
        %1658 = vmatpush.bf16.msra.mxu0 %v1037
        %1659 = vmatpush.bf16.msra.mxu0 %v1029
        %1660 = vmatpush.bf16.msra.mxu0 %v1021
        %1661 = vmatpush.bf16.msra.mxu0 %v1013
        %1662 = vmatpush.bf16.msra.mxu0 %v1005
        %1663 = vmatmul.bf16.gmra.mxu0 %v223
        %v1664 = vpop.f32.mrf.mxu0
        %v1665 = vadd.f32 0.0, %v1664
        %v1666 = vpop.f32.mrf.mxu0
        %1667 = vdwg.mxu0
        %1668 = vmatpush.bf16.msra.mxu0 %v1125
        %1669 = vmatpush.bf16.msra.mxu0 %v1117
        %1670 = vmatpush.bf16.msra.mxu0 %v1109
        %1671 = vmatpush.bf16.msra.mxu0 %v1101
        %1672 = vmatpush.bf16.msra.mxu0 %v1093
        %1673 = vmatpush.bf16.msra.mxu0 %v1085
        %1674 = vmatpush.bf16.msra.mxu0 %v1077
        %1675 = vmatpush.bf16.msra.mxu0 %v1069
        %1676 = vmatmul.bf16.gmra.mxu0 %v226
        %v1677 = vpop.f32.mrf.mxu0
        %v1678 = vadd.f32 %v1665, %v1677
        %v1679 = vpop.f32.mrf.mxu0
        %1680 = vdwg.mxu0
        %1681 = vmatpush.bf16.msra.mxu0 %v1189
        %1682 = vmatpush.bf16.msra.mxu0 %v1181
        %1683 = vmatpush.bf16.msra.mxu0 %v1173
        %1684 = vmatpush.bf16.msra.mxu0 %v1165
        %1685 = vmatpush.bf16.msra.mxu0 %v1157
        %1686 = vmatpush.bf16.msra.mxu0 %v1149
        %1687 = vmatpush.bf16.msra.mxu0 %v1141
        %1688 = vmatpush.bf16.msra.mxu0 %v1133
        %1689 = vmatmul.bf16.gmra.mxu0 %v229
        %v1690 = vpop.f32.mrf.mxu0
        %v1691 = vadd.f32 %v1678, %v1690
        %v1692 = vpop.f32.mrf.mxu0
        %1693 = vdwg.mxu0
        %v1694 = vld [vmem:[#allocation7] sm:$0xff]
        %v1696 = vperm.slane %v1694, 0
        %v1697 = vperm.slane %v1694, 1
        %v1698 = vperm.slane %v1694, 2
        %v1699 = vperm.slane %v1694, 3
        %v1700 = vperm.slane %v1694, 4
        %v1701 = vperm.slane %v1694, 5
        %v1702 = vperm.slane %v1694, 6
        %v1703 = vperm.slane %v1694, 7
        %v1712 = vsub.f32 %v1418, %v1696
        %v1713 = vsub.f32 %v1457, %v1697
        %v1714 = vsub.f32 %v1496, %v1698
        %v1715 = vsub.f32 %v1535, %v1699
        %v1716 = vsub.f32 %v1574, %v1700
        %v1717 = vsub.f32 %v1613, %v1701
        %v1718 = vsub.f32 %v1652, %v1702
        %v1719 = vsub.f32 %v1691, %v1703
        %v1720 = vmul.f32 %v1712, %v1712
        %v1721 = vmul.f32 %v1713, %v1713
        %v1722 = vmul.f32 %v1714, %v1714
        %v1723 = vmul.f32 %v1715, %v1715
        %v1724 = vmul.f32 %v1716, %v1716
        %v1725 = vmul.f32 %v1717, %v1717
        %v1726 = vmul.f32 %v1718, %v1718
        %v1727 = vmul.f32 %v1719, %v1719
        %v1728 = vsub.f32 0.0, %v1720
        %v1729 = vsub.f32 0.0, %v1721
        %v1730 = vsub.f32 0.0, %v1722
        %v1731 = vsub.f32 0.0, %v1723
        %v1732 = vsub.f32 0.0, %v1724
        %v1733 = vsub.f32 0.0, %v1725
        %v1734 = vsub.f32 0.0, %v1726
        %v1735 = vsub.f32 0.0, %v1727
        %v1736 = vmul.f32 %v1728, 1.442695
        %v1737 = vpow.pop %v1736
        %v1738 = vmul.f32 %v1729, 1.442695
        %v1739 = vpow.pop %v1738
        %v1740 = vmul.f32 %v1730, 1.442695
        %v1741 = vpow.pop %v1740
        %v1742 = vmul.f32 %v1731, 1.442695
        %v1743 = vpow.pop %v1742
        %v1744 = vmul.f32 %v1732, 1.442695
        %v1745 = vpow.pop %v1744
        %v1746 = vmul.f32 %v1733, 1.442695
        %v1747 = vpow.pop %v1746
        %v1748 = vmul.f32 %v1734, 1.442695
        %v1749 = vpow.pop %v1748
        %v1750 = vmul.f32 %v1735, 1.442695
        %v1751 = vpow.pop %v1750
        %1752 = vst [vmem:[%s218] sm:$0xff] %v1737
        %1753 = vst [vmem:[%s218 + $0x8] sm:$0xff] %v1739
        %1754 = vst [vmem:[%s218 + $0x10] sm:$0xff] %v1741
        %1755 = vst [vmem:[%s218 + $0x18] sm:$0xff] %v1743
        %1756 = vst [vmem:[%s218 + $0x20] sm:$0xff] %v1745
        %1757 = vst [vmem:[%s218 + $0x28] sm:$0xff] %v1747
        %1758 = vst [vmem:[%s218 + $0x30] sm:$0xff] %v1749
        %1759 = vst [vmem:[%s218 + $0x38] sm:$0xff] %v1751
        %s1760 = sand.u32 %s97, 1
        %s1761 = scalar_lea.sflag [#allocation4], %s1760
        %s1762 = sand.u32 %s97, 1
        %s1763 = smul.addr %s1762, 64
        %s1764 = scalar_lea.vmem [#allocation8], %s1763
        // Predicated region
        $region45: #{tpu_custom_call.1} parent=31 // pred_check
          %p1765 = pneg %p107
        $region46: #{tpu_custom_call.1} parent=31 // pred_check_branch
          %1767 = sbr.rel (%p1765) target = $region48
        $region47: #{tpu_custom_call.1} parent=31 // pred_region
          %1769 = vsyncadd %s1761, 0
          %s1770 = smul.addr %s21, 8
          %s1771 = smul.addr %s1770, 8
          %s1772 = scalar_lea.hbm %s3, %s1771
          %s1774 = sshll.u32 %s1764, 4
          %s1775 = int_to_ptr.vmem [resolvable:$true] %s1774
          %s1776 = sshll.u32 %s1772, 4
          %s1777 = int_to_ptr.hbm [resolvable:$true] %s1776
          %1779 = dma.vmem_to_hbm [thread:$0]  %s1775, 1024, %s1777, %s1761
        $region48: #{tpu_custom_call.1} parent=31 // pred_fallthru
          _
      $region32: #{tpu_custom_call.1} parent=5 // pred_fallthru
        _
      %p1780 = scmp.le.s32.totalorder 2, %s16
      // Predicated region
      $region49: #{tpu_custom_call.1} parent=5 // pred_check
        %p1781 = pneg %p1780
      $region50: #{tpu_custom_call.1} parent=5 // pred_check_branch
        %1783 = sbr.rel (%p1781) target = $region52
      $region51: #{tpu_custom_call.1} parent=5 // pred_region
        %s1784 = ssub.s32 %s16, 2
        // Predicated region
        $region53: #{tpu_custom_call.1} parent=51 // pred_check
          %p1785 = pneg %p113
        $region54: #{tpu_custom_call.1} parent=51 // pred_check_branch
          %1787 = sbr.rel (%p1785) target = $region56
        $region55: #{tpu_custom_call.1} parent=51 // pred_region
          %s1788 = sand.u32 %s98, 1
          %s1789 = scalar_lea.sflag [#allocation4], %s1788
          %s1790 = sand.u32 %s98, 1
          %s1791 = smul.addr %s1790, 64
          %s1792 = scalar_lea.vmem [#allocation8], %s1791
          %1794 = dma.done %s1789, 1024
        $region56: #{tpu_custom_call.1} parent=51 // pred_fallthru
          _
      $region52: #{tpu_custom_call.1} parent=5 // pred_fallthru
        _
    $region6: #{tpu_custom_call.1} parent=1 // loop_footer
      %s20 = sadd.s32 1, %s16
    $region7: #{tpu_custom_call.1} parent=1 // loop_footer_branch
      %15 = sbr.rel target = $region3
    $region8: #{tpu_custom_call.1} parent=1 // loop_exit
      _
    %1795 = vsyncpa [#allocation3], 1
    %s1796 = scalar_lea.sflag [#allocation3], 1
    %1797 = vsyncpa %s1796, 1
    %1798 = vsyncpa [#allocation6], 1
    %1799 = vsyncpa [#allocation4], 1
    %s1800 = scalar_lea.sflag [#allocation4], 1
    %1801 = vsyncpa %s1800, 1

// kernel: tpu_custom_call.1
$region0: #{tpu_custom_call.1}
  #allocation0 [shape = 'u32[]', space=smem, size = 0x4, offset = 0x4, fixed_abs, tag = 'smem constant byte address 0x4 - core index']
  #allocation1 [shape = 'u32[72,128]{1,0:T(1,128)}', space=vmem, size = 0x9000, scoped, tag = 'internal scratch']
  %s0 = inlined_call_operand.hbm [shape: f32[16,128], index: 0, kind: input, shape index: {}]
  %s1 = inlined_call_operand.hbm [shape: bf16[384,1024], index: 1, kind: input, shape index: {}]
  %s2 = inlined_call_operand.hbm [shape: f32[1,1024], index: 2, kind: input, shape index: {}]
  %s3 = inlined_call_operand.hbm [shape: f32[16,1024], index: 3, kind: output, shape index: {}]
  %s4 = sld [smem:[#allocation0]]
  $region57: #{tpu_custom_call.1} parent=0
    _
  %s6 = ssub.s32 1, %s4
  %s7 = scalar_select 0, %s6, %s4
  $region1: #{tpu_custom_call.1} parent=0
    #allocation2 [shape = 'u8[8192]{0}', space=vmem, size = 0x2000, scoped, tag = 'input window, operand 0']
    #allocation3 [shape = 's32[2]{0}', space=sflag, size = 0x8, scoped, tag = 'scoped memory for tpu_custom_call.1']
    #allocation4 [shape = 's32[2]{0}', space=sflag, size = 0x8, scoped, tag = 'scoped memory for tpu_custom_call.1']
    #allocation5 [shape = 'u8[786432]{0}', space=vmem, size = 0xc0000, scoped, tag = 'input window, operand 1, single buffered']
    #allocation6 [shape = 's32[1]{0}', space=sflag, size = 0x4, scoped, tag = 'scoped memory for tpu_custom_call.1']
    #allocation7 [shape = 'u8[4096]{0}', space=vmem, size = 0x1000, scoped, tag = 'input window, operand 2, single buffered']
    #allocation8 [shape = 'u8[65536]{0}', space=vmem, size = 0x10000, scoped, tag = 'output window, operand 0']
    %8 = vsyncpa [#allocation3], 0
    %s9 = scalar_lea.sflag [#allocation3], 1
    %10 = vsyncpa %s9, 0
    %11 = vsyncpa [#allocation6], 0
    %12 = vsyncpa [#allocation4], 0
    %s13 = scalar_lea.sflag [#allocation4], 1
    %14 = vsyncpa %s13, 0
    loop: start=0, step=1, limit=4
    $region2: #{tpu_custom_call.1} parent=1 // loop_pre_header
      _
    $region3: #{tpu_custom_call.1} parent=1 // loop_header
      %s16 = sphi 0, %s20
      %p17 = scmp.ge.s32.totalorder %s16, 4
      %s26 = sphi 0, %s28
      %s29 = sphi 0, %s26
      %s30 = sphi 0, %s29
      %s46 = sphi 0, %s30
      %s50 = sphi 0, %s50
      %s52 = sphi 0, %s50
      %s53 = sphi 0, %s52
      %s67 = sphi 0, %s53
      %s71 = sphi 0, %s71
      %s73 = sphi 0, %s71
      %s74 = sphi 0, %s73
      %s88 = sphi 0, %s74
      %s94 = sphi 0, %s96
      %s97 = sphi 0, %s94
      %s98 = sphi 0, %s97
      %s114 = sphi 0, %s98
    $region4: #{tpu_custom_call.1} parent=1 // loop_header_branch
      %19 = sbr.rel (%p17) target = $region8
    $region5: #{tpu_custom_call.1} parent=1 // loop_body
      %s21 = ssub.s32 %s16, 1
      %s22 = ssub.s32 %s16, 2
      %s23 = sadd.s32 %s16, 1
      %s24 = ssub.s32 %s16, %s23
      %p25 = scmp.eq.s32.totalorder %s24, 0
      %s27 = sadd.s32 %s26, 1
      %s28 = scalar_select %p25, %s26, %s27
      %p31 = pneg %p25
      %p32 = scmp.eq.s32.totalorder %s16, 1
      %p33 = por %p31, %p32
      %p34 = scmp.ne.s32.totalorder %s26, %s29
      %p35 = scmp.eq.s32.totalorder %s16, 0
      %p36 = por %p34, %p35
      %p37 = scmp.ne.s32.totalorder %s26, %s29
      %p38 = scmp.eq.s32.totalorder %s21, 1
      %p39 = por %p37, %p38
      %p40 = scmp.ne.s32.totalorder %s29, %s30
      %p41 = scmp.eq.s32.totalorder %s21, 0
      %p42 = por %p40, %p41
      %p43 = scmp.ne.s32.totalorder %s29, %s30
      %p44 = scmp.eq.s32.totalorder %s22, 1
      %p45 = por %p43, %p44
      %p47 = scmp.ne.s32.totalorder %s30, %s46
      %p48 = scmp.eq.s32.totalorder %s22, 0
      %p49 = por %p47, %p48
      %s51 = sadd.s32 %s50, 1
      %p54 = scmp.eq.s32.totalorder %s16, 1
      %p55 = scmp.ne.s32.totalorder %s50, %s52
      %p56 = scmp.eq.s32.totalorder %s16, 0
      %p57 = por %p55, %p56
      %p58 = scmp.ne.s32.totalorder %s50, %s52
      %p59 = scmp.eq.s32.totalorder %s21, 1
      %p60 = por %p58, %p59
      %p61 = scmp.ne.s32.totalorder %s52, %s53
      %p62 = scmp.eq.s32.totalorder %s21, 0
      %p63 = por %p61, %p62
      %p64 = scmp.ne.s32.totalorder %s52, %s53
      %p65 = scmp.eq.s32.totalorder %s22, 1
      %p66 = por %p64, %p65
      %p68 = scmp.ne.s32.totalorder %s53, %s67
      %p69 = scmp.eq.s32.totalorder %s22, 0
      %p70 = por %p68, %p69
      %s72 = sadd.s32 %s71, 1
      %p75 = scmp.eq.s32.totalorder %s16, 1
      %p76 = scmp.ne.s32.totalorder %s71, %s73
      %p77 = scmp.eq.s32.totalorder %s16, 0
      %p78 = por %p76, %p77
      %p79 = scmp.ne.s32.totalorder %s71, %s73
      %p80 = scmp.eq.s32.totalorder %s21, 1
      %p81 = por %p79, %p80
      %p82 = scmp.ne.s32.totalorder %s73, %s74
      %p83 = scmp.eq.s32.totalorder %s21, 0
      %p84 = por %p82, %p83
      %p85 = scmp.ne.s32.totalorder %s73, %s74
      %p86 = scmp.eq.s32.totalorder %s22, 1
      %p87 = por %p85, %p86
      %p89 = scmp.ne.s32.totalorder %s74, %s88
      %p90 = scmp.eq.s32.totalorder %s22, 0
      %p91 = por %p89, %p90
      %s92 = ssub.s32 %s16, %s23
      %p93 = scmp.eq.s32.totalorder %s92, 0
      %s95 = sadd.s32 %s94, 1
      %s96 = scalar_select %p93, %s94, %s95
      %p99 = pneg %p93
      %p100 = scmp.eq.s32.totalorder %s16, 1
      %p101 = por %p99, %p100
      %p102 = scmp.ne.s32.totalorder %s94, %s97
      %p103 = scmp.eq.s32.totalorder %s16, 0
      %p104 = por %p102, %p103
      %p105 = scmp.ne.s32.totalorder %s94, %s97
      %p106 = scmp.eq.s32.totalorder %s21, 1
      %p107 = por %p105, %p106
      %p108 = scmp.ne.s32.totalorder %s97, %s98
      %p109 = scmp.eq.s32.totalorder %s21, 0
      %p110 = por %p108, %p109
      %p111 = scmp.ne.s32.totalorder %s97, %s98
      %p112 = scmp.eq.s32.totalorder %s22, 1
      %p113 = por %p111, %p112
      %p115 = scmp.ne.s32.totalorder %s98, %s114
      %p116 = scmp.eq.s32.totalorder %s22, 0
      %p117 = por %p115, %p116
      %p118 = scmp.le.s32.totalorder 1, %s16
      %p119 = scmp.lt.s32.totalorder %s16, 3
      %p120 = pnand %p118, %p119
      %p121 = pneg %p120
      // Predicated region
      $region9: #{tpu_custom_call.1} parent=5 // pred_check
        _
      $region10: #{tpu_custom_call.1} parent=5 // pred_check_branch
        %123 = sbr.rel (%p120) target = $region12
      $region11: #{tpu_custom_call.1} parent=5 // pred_region
        %s124 = ssub.s32 %s16, 1
        // Predicated region
        $region13: #{tpu_custom_call.1} parent=11 // pred_check
          %p125 = pneg %p63
        $region14: #{tpu_custom_call.1} parent=11 // pred_check_branch
          %127 = sbr.rel (%p125) target = $region16
        $region15: #{tpu_custom_call.1} parent=11 // pred_region
          %129 = vsyncadd [#allocation6], 0
          %s130 = sshll.u32 %s1, 4
          %s131 = int_to_ptr.hbm [resolvable:$true] %s130
          %s132 = sshll.u32 [#allocation5], 4
          %s133 = int_to_ptr.vmem [resolvable:$true] %s132
          %138 = dma.hbm_to_vmem [thread:$0]  %s131, 24576, %s133, [#allocation6], 512, 512, 32
        $region16: #{tpu_custom_call.1} parent=11 // pred_fallthru
          _
        // Predicated region
        $region17: #{tpu_custom_call.1} parent=11 // pred_check
          %p139 = pneg %p84
        $region18: #{tpu_custom_call.1} parent=11 // pred_check_branch
          %141 = sbr.rel (%p139) target = $region20
        $region19: #{tpu_custom_call.1} parent=11 // pred_region
          %143 = vsyncadd [#allocation6], 0
          %s145 = sshll.u32 %s2, 4
          %s146 = int_to_ptr.hbm [resolvable:$true] %s145
          %s147 = sshll.u32 [#allocation7], 4
          %s148 = int_to_ptr.vmem [resolvable:$true] %s147
          %150 = dma.hbm_to_vmem [thread:$0]  %s146, 128, %s148, [#allocation6]
        $region20: #{tpu_custom_call.1} parent=11 // pred_fallthru
          _
      $region12: #{tpu_custom_call.1} parent=5 // pred_fallthru
        _
      %p151 = scmp.lt.s32.totalorder %s16, 2
      // Predicated region
      $region21: #{tpu_custom_call.1} parent=5 // pred_check
        %p152 = pneg %p151
      $region22: #{tpu_custom_call.1} parent=5 // pred_check_branch
        %154 = sbr.rel (%p152) target = $region24
      $region23: #{tpu_custom_call.1} parent=5 // pred_region
        // Predicated region
        $region25: #{tpu_custom_call.1} parent=23 // pred_check
          %p155 = pneg %p36
        $region26: #{tpu_custom_call.1} parent=23 // pred_check_branch
          %157 = sbr.rel (%p155) target = $region28
        $region27: #{tpu_custom_call.1} parent=23 // pred_region
          %s158 = sand.u32 %s26, 1
          %s159 = scalar_lea.sflag [#allocation3], %s158
          %s160 = sand.u32 %s26, 1
          %s161 = smul.addr %s160, 8
          %s162 = scalar_lea.vmem [#allocation2], %s161
          %164 = vsyncadd %s159, 0
          %s165 = smul.addr %s16, 8
          %s166 = scalar_lea.hbm %s0, %s165
          %s168 = sshll.u32 %s166, 4
          %s169 = int_to_ptr.hbm [resolvable:$true] %s168
          %s170 = sshll.u32 %s162, 4
          %s171 = int_to_ptr.vmem [resolvable:$true] %s170
          %173 = dma.hbm_to_vmem [thread:$0]  %s169, 128, %s171, %s159
        $region28: #{tpu_custom_call.1} parent=23 // pred_fallthru
          _
      $region24: #{tpu_custom_call.1} parent=5 // pred_fallthru
        _
      %p174 = scmp.le.s32.totalorder 1, %s16
      %p175 = scmp.lt.s32.totalorder %s16, 3
      %p176 = pnand %p174, %p175
      %p177 = pneg %p176
      // Predicated region
      $region29: #{tpu_custom_call.1} parent=5 // pred_check
        _
      $region30: #{tpu_custom_call.1} parent=5 // pred_check_branch
        %179 = sbr.rel (%p176) target = $region32
      $region31: #{tpu_custom_call.1} parent=5 // pred_region
        %s180 = ssub.s32 %s16, 1
        %s181 = sand.u32 %s29, 1
        %s182 = scalar_lea.sflag [#allocation3], %s181
        %s183 = sand.u32 %s29, 1
        %s184 = smul.addr %s183, 8
        %s185 = scalar_lea.vmem [#allocation2], %s184
        // Predicated region
        $region33: #{tpu_custom_call.1} parent=31 // pred_check
          %p186 = pneg %p42
        $region34: #{tpu_custom_call.1} parent=31 // pred_check_branch
          %188 = sbr.rel (%p186) target = $region36
        $region35: #{tpu_custom_call.1} parent=31 // pred_region
          %190 = dma.done %s182, 128
        $region36: #{tpu_custom_call.1} parent=31 // pred_fallthru
          _
        // Predicated region
        $region37: #{tpu_custom_call.1} parent=31 // pred_check
          %p191 = pneg %p63
        $region38: #{tpu_custom_call.1} parent=31 // pred_check_branch
          %193 = sbr.rel (%p191) target = $region40
        $region39: #{tpu_custom_call.1} parent=31 // pred_region
          %195 = dma.done [#allocation6], 24576
        $region40: #{tpu_custom_call.1} parent=31 // pred_fallthru
          _
        // Predicated region
        $region41: #{tpu_custom_call.1} parent=31 // pred_check
          %p196 = pneg %p84
        $region42: #{tpu_custom_call.1} parent=31 // pred_check_branch
          %198 = sbr.rel (%p196) target = $region44
        $region43: #{tpu_custom_call.1} parent=31 // pred_region
          %200 = dma.done [#allocation6], 128
        $region44: #{tpu_custom_call.1} parent=31 // pred_fallthru
          _
        %s201 = sand.u32 %s29, 1
        %s202 = scalar_lea.sflag [#allocation3], %s201
        %s203 = sand.u32 %s29, 1
        %s204 = smul.addr %s203, 8
        %s205 = scalar_lea.vmem [#allocation2], %s204
        %p206 = pneg %p42
        %p207 = pneg %p39
        %p208 = pneg %p63
        %p209 = pneg %p60
        %p210 = pneg %p84
        %p211 = pneg %p81
        %p212 = pneg %p110
        %p213 = pneg %p107
        %s214 = sand.u32 %s97, 1
        %s215 = scalar_lea.sflag [#allocation4], %s214
        %s216 = sand.u32 %s97, 1
        %s217 = smul.addr %s216, 64
        %s218 = scalar_lea.vmem [#allocation8], %s217
        %v219 = vld [vmem:[%s185] sm:$0xff]
        %v220 = vmul.f32 %v219, 2.3333333
        %v221 = vmax.f32 %v220, -1000000.0
        %v222 = vmin.f32 %v221, 1000000.0
        %v223 = vpack.c.bf16 %v222, %v222
        %v224 = vunpack.c.l.bf16 %v223
        %v225 = vsub.f32 %v222, %v224
        %v226 = vpack.c.bf16 %v225, %v225
        %v227 = vunpack.c.l.bf16 %v226
        %v228 = vsub.f32 %v225, %v227
        %v229 = vpack.c.bf16 %v228, %v228
        %v230 = vld [vmem:[#allocation5] sm:$0xff]
        %v231 = vld [vmem:[#allocation5 + $0x8] sm:$0xff]
        %v232 = vld [vmem:[#allocation5 + $0x10] sm:$0xff]
        %v233 = vld [vmem:[#allocation5 + $0x18] sm:$0xff]
        %v234 = vld [vmem:[#allocation5 + $0x20] sm:$0xff]
        %v235 = vld [vmem:[#allocation5 + $0x28] sm:$0xff]
        %v236 = vld [vmem:[#allocation5 + $0x30] sm:$0xff]
        %v237 = vld [vmem:[#allocation5 + $0x38] sm:$0xff]
        %v238 = vld [vmem:[#allocation5 + $0x40] sm:$0xff]
        %v239 = vld [vmem:[#allocation5 + $0x48] sm:$0xff]
        %v240 = vld [vmem:[#allocation5 + $0x50] sm:$0xff]
        %v241 = vld [vmem:[#allocation5 + $0x58] sm:$0xff]
        %v242 = vld [vmem:[#allocation5 + $0x60] sm:$0xff]
        %v243 = vld [vmem:[#allocation5 + $0x68] sm:$0xff]
        %v244 = vld [vmem:[#allocation5 + $0x70] sm:$0xff]
        %v245 = vld [vmem:[#allocation5 + $0x78] sm:$0xff]
        %v246 = vld [vmem:[#allocation5 + $0x80] sm:$0xff]
        %v247 = vld [vmem:[#allocation5 + $0x88] sm:$0xff]
        %v248 = vld [vmem:[#allocation5 + $0x90] sm:$0xff]
        %v249 = vld [vmem:[#allocation5 + $0x98] sm:$0xff]
        %v250 = vld [vmem:[#allocation5 + $0xa0] sm:$0xff]
        %v251 = vld [vmem:[#allocation5 + $0xa8] sm:$0xff]
        %v252 = vld [vmem:[#allocation5 + $0xb0] sm:$0xff]
        %v253 = vld [vmem:[#allocation5 + $0xb8] sm:$0xff]
        %v254 = vld [vmem:[#allocation5 + $0xc0] sm:$0xff]
        %v255 = vld [vmem:[#allocation5 + $0xc8] sm:$0xff]
        %v256 = vld [vmem:[#allocation5 + $0xd0] sm:$0xff]
        %v257 = vld [vmem:[#allocation5 + $0xd8] sm:$0xff]
        %v258 = vld [vmem:[#allocation5 + $0xe0] sm:$0xff]
        %v259 = vld [vmem:[#allocation5 + $0xe8] sm:$0xff]
        %v260 = vld [vmem:[#allocation5 + $0xf0] sm:$0xff]
        %v261 = vld [vmem:[#allocation5 + $0xf8] sm:$0xff]
        %v262 = vld [vmem:[#allocation5 + $0x100] sm:$0xff]
        %v263 = vld [vmem:[#allocation5 + $0x108] sm:$0xff]
        %v264 = vld [vmem:[#allocation5 + $0x110] sm:$0xff]
        %v265 = vld [vmem:[#allocation5 + $0x118] sm:$0xff]
        %v266 = vld [vmem:[#allocation5 + $0x120] sm:$0xff]
        %v267 = vld [vmem:[#allocation5 + $0x128] sm:$0xff]
        %v268 = vld [vmem:[#allocation5 + $0x130] sm:$0xff]
        %v269 = vld [vmem:[#allocation5 + $0x138] sm:$0xff]
        %v270 = vld [vmem:[#allocation5 + $0x140] sm:$0xff]
        %v271 = vld [vmem:[#allocation5 + $0x148] sm:$0xff]
        %v272 = vld [vmem:[#allocation5 + $0x150] sm:$0xff]
        %v273 = vld [vmem:[#allocation5 + $0x158] sm:$0xff]
        %v274 = vld [vmem:[#allocation5 + $0x160] sm:$0xff]
        %v275 = vld [vmem:[#allocation5 + $0x168] sm:$0xff]
        %v276 = vld [vmem:[#allocation5 + $0x170] sm:$0xff]
        %v277 = vld [vmem:[#allocation5 + $0x178] sm:$0xff]
        %v278 = vld [vmem:[#allocation5 + $0x180] sm:$0xff]
        %v279 = vld [vmem:[#allocation5 + $0x188] sm:$0xff]
        %v280 = vld [vmem:[#allocation5 + $0x190] sm:$0xff]
        %v281 = vld [vmem:[#allocation5 + $0x198] sm:$0xff]
        %v282 = vld [vmem:[#allocation5 + $0x1a0] sm:$0xff]
        %v283 = vld [vmem:[#allocation5 + $0x1a8] sm:$0xff]
        %v284 = vld [vmem:[#allocation5 + $0x1b0] sm:$0xff]
        %v285 = vld [vmem:[#allocation5 + $0x1b8] sm:$0xff]
        %v286 = vld [vmem:[#allocation5 + $0x1c0] sm:$0xff]
        %v287 = vld [vmem:[#allocation5 + $0x1c8] sm:$0xff]
        %v288 = vld [vmem:[#allocation5 + $0x1d0] sm:$0xff]
        %v289 = vld [vmem:[#allocation5 + $0x1d8] sm:$0xff]
        %v290 = vld [vmem:[#allocation5 + $0x1e0] sm:$0xff]
        %v291 = vld [vmem:[#allocation5 + $0x1e8] sm:$0xff]
        %v292 = vld [vmem:[#allocation5 + $0x1f0] sm:$0xff]
        %v293 = vld [vmem:[#allocation5 + $0x1f8] sm:$0xff]
        %v294 = vld [vmem:[#allocation5 + $0x200] sm:$0xff]
        %v295 = vld [vmem:[#allocation5 + $0x208] sm:$0xff]
        %v296 = vld [vmem:[#allocation5 + $0x210] sm:$0xff]
        %v297 = vld [vmem:[#allocation5 + $0x218] sm:$0xff]
        %v298 = vld [vmem:[#allocation5 + $0x220] sm:$0xff]
        %v299 = vld [vmem:[#allocation5 + $0x228] sm:$0xff]
        %v300 = vld [vmem:[#allocation5 + $0x230] sm:$0xff]
        %v301 = vld [vmem:[#allocation5 + $0x238] sm:$0xff]
        %v302 = vld [vmem:[#allocation5 + $0x240] sm:$0xff]
        %v303 = vld [vmem:[#allocation5 + $0x248] sm:$0xff]
        %v304 = vld [vmem:[#allocation5 + $0x250] sm:$0xff]
        %v305 = vld [vmem:[#allocation5 + $0x258] sm:$0xff]
        %v306 = vld [vmem:[#allocation5 + $0x260] sm:$0xff]
        %v307 = vld [vmem:[#allocation5 + $0x268] sm:$0xff]
        %v308 = vld [vmem:[#allocation5 + $0x270] sm:$0xff]
        %v309 = vld [vmem:[#allocation5 + $0x278] sm:$0xff]
        %v310 = vld [vmem:[#allocation5 + $0x280] sm:$0xff]
        %v311 = vld [vmem:[#allocation5 + $0x288] sm:$0xff]
        %v312 = vld [vmem:[#allocation5 + $0x290] sm:$0xff]
        %v313 = vld [vmem:[#allocation5 + $0x298] sm:$0xff]
        %v314 = vld [vmem:[#allocation5 + $0x2a0] sm:$0xff]
        %v315 = vld [vmem:[#allocation5 + $0x2a8] sm:$0xff]
        %v316 = vld [vmem:[#allocation5 + $0x2b0] sm:$0xff]
        %v317 = vld [vmem:[#allocation5 + $0x2b8] sm:$0xff]
        %v318 = vld [vmem:[#allocation5 + $0x2c0] sm:$0xff]
        %v319 = vld [vmem:[#allocation5 + $0x2c8] sm:$0xff]
        %v320 = vld [vmem:[#allocation5 + $0x2d0] sm:$0xff]
        %v321 = vld [vmem:[#allocation5 + $0x2d8] sm:$0xff]
        %v322 = vld [vmem:[#allocation5 + $0x2e0] sm:$0xff]
        %v323 = vld [vmem:[#allocation5 + $0x2e8] sm:$0xff]
        %v324 = vld [vmem:[#allocation5 + $0x2f0] sm:$0xff]
        %v325 = vld [vmem:[#allocation5 + $0x2f8] sm:$0xff]
        %v326 = vld [vmem:[#allocation5 + $0x300] sm:$0xff]
        %v327 = vld [vmem:[#allocation5 + $0x308] sm:$0xff]
        %v328 = vld [vmem:[#allocation5 + $0x310] sm:$0xff]
        %v329 = vld [vmem:[#allocation5 + $0x318] sm:$0xff]
        %v330 = vld [vmem:[#allocation5 + $0x320] sm:$0xff]
        %v331 = vld [vmem:[#allocation5 + $0x328] sm:$0xff]
        %v332 = vld [vmem:[#allocation5 + $0x330] sm:$0xff]
        %v333 = vld [vmem:[#allocation5 + $0x338] sm:$0xff]
        %v334 = vld [vmem:[#allocation5 + $0x340] sm:$0xff]
        %v335 = vld [vmem:[#allocation5 + $0x348] sm:$0xff]
        %v336 = vld [vmem:[#allocation5 + $0x350] sm:$0xff]
        %v337 = vld [vmem:[#allocation5 + $0x358] sm:$0xff]
        %v338 = vld [vmem:[#allocation5 + $0x360] sm:$0xff]
        %v339 = vld [vmem:[#allocation5 + $0x368] sm:$0xff]
        %v340 = vld [vmem:[#allocation5 + $0x370] sm:$0xff]
        %v341 = vld [vmem:[#allocation5 + $0x378] sm:$0xff]
        %v342 = vld [vmem:[#allocation5 + $0x380] sm:$0xff]
        %v343 = vld [vmem:[#allocation5 + $0x388] sm:$0xff]
        %v344 = vld [vmem:[#allocation5 + $0x390] sm:$0xff]
        %v345 = vld [vmem:[#allocation5 + $0x398] sm:$0xff]
        %v346 = vld [vmem:[#allocation5 + $0x3a0] sm:$0xff]
        %v347 = vld [vmem:[#allocation5 + $0x3a8] sm:$0xff]
        %v348 = vld [vmem:[#allocation5 + $0x3b0] sm:$0xff]
        %v349 = vld [vmem:[#allocation5 + $0x3b8] sm:$0xff]
        %v350 = vld [vmem:[#allocation5 + $0x3c0] sm:$0xff]
        %v351 = vld [vmem:[#allocation5 + $0x3c8] sm:$0xff]
        %v352 = vld [vmem:[#allocation5 + $0x3d0] sm:$0xff]
        %v353 = vld [vmem:[#allocation5 + $0x3d8] sm:$0xff]
        %v354 = vld [vmem:[#allocation5 + $0x3e0] sm:$0xff]
        %v355 = vld [vmem:[#allocation5 + $0x3e8] sm:$0xff]
        %v356 = vld [vmem:[#allocation5 + $0x3f0] sm:$0xff]
        %v357 = vld [vmem:[#allocation5 + $0x3f8] sm:$0xff]
        %v358 = vld [vmem:[#allocation5 + $0x400] sm:$0xff]
        %v359 = vld [vmem:[#allocation5 + $0x408] sm:$0xff]
        %v360 = vld [vmem:[#allocation5 + $0x410] sm:$0xff]
        %v361 = vld [vmem:[#allocation5 + $0x418] sm:$0xff]
        %v362 = vld [vmem:[#allocation5 + $0x420] sm:$0xff]
        %v363 = vld [vmem:[#allocation5 + $0x428] sm:$0xff]
        %v364 = vld [vmem:[#allocation5 + $0x430] sm:$0xff]
        %v365 = vld [vmem:[#allocation5 + $0x438] sm:$0xff]
        %v366 = vld [vmem:[#allocation5 + $0x440] sm:$0xff]
        %v367 = vld [vmem:[#allocation5 + $0x448] sm:$0xff]
        %v368 = vld [vmem:[#allocation5 + $0x450] sm:$0xff]
        %v369 = vld [vmem:[#allocation5 + $0x458] sm:$0xff]
        %v370 = vld [vmem:[#allocation5 + $0x460] sm:$0xff]
        %v371 = vld [vmem:[#allocation5 + $0x468] sm:$0xff]
        %v372 = vld [vmem:[#allocation5 + $0x470] sm:$0xff]
        %v373 = vld [vmem:[#allocation5 + $0x478] sm:$0xff]
        %v374 = vld [vmem:[#allocation5 + $0x480] sm:$0xff]
        %v375 = vld [vmem:[#allocation5 + $0x488] sm:$0xff]
        %v376 = vld [vmem:[#allocation5 + $0x490] sm:$0xff]
        %v377 = vld [vmem:[#allocation5 + $0x498] sm:$0xff]
        %v378 = vld [vmem:[#allocation5 + $0x4a0] sm:$0xff]
        %v379 = vld [vmem:[#allocation5 + $0x4a8] sm:$0xff]
        %v380 = vld [vmem:[#allocation5 + $0x4b0] sm:$0xff]
        %v381 = vld [vmem:[#allocation5 + $0x4b8] sm:$0xff]
        %v382 = vld [vmem:[#allocation5 + $0x4c0] sm:$0xff]
        %v383 = vld [vmem:[#allocation5 + $0x4c8] sm:$0xff]
        %v384 = vld [vmem:[#allocation5 + $0x4d0] sm:$0xff]
        %v385 = vld [vmem:[#allocation5 + $0x4d8] sm:$0xff]
        %v386 = vld [vmem:[#allocation5 + $0x4e0] sm:$0xff]
        %v387 = vld [vmem:[#allocation5 + $0x4e8] sm:$0xff]
        %v388 = vld [vmem:[#allocation5 + $0x4f0] sm:$0xff]
        %v389 = vld [vmem:[#allocation5 + $0x4f8] sm:$0xff]
        %v390 = vld [vmem:[#allocation5 + $0x500] sm:$0xff]
        %v391 = vld [vmem:[#allocation5 + $0x508] sm:$0xff]
        %v392 = vld [vmem:[#allocation5 + $0x510] sm:$0xff]
        %v393 = vld [vmem:[#allocation5 + $0x518] sm:$0xff]
        %v394 = vld [vmem:[#allocation5 + $0x520] sm:$0xff]
        %v395 = vld [vmem:[#allocation5 + $0x528] sm:$0xff]
        %v396 = vld [vmem:[#allocation5 + $0x530] sm:$0xff]
        %v397 = vld [vmem:[#allocation5 + $0x538] sm:$0xff]
        %v398 = vld [vmem:[#allocation5 + $0x540] sm:$0xff]
        %v399 = vld [vmem:[#allocation5 + $0x548] sm:$0xff]
        %v400 = vld [vmem:[#allocation5 + $0x550] sm:$0xff]
        %v401 = vld [vmem:[#allocation5 + $0x558] sm:$0xff]
        %v402 = vld [vmem:[#allocation5 + $0x560] sm:$0xff]
        %v403 = vld [vmem:[#allocation5 + $0x568] sm:$0xff]
        %v404 = vld [vmem:[#allocation5 + $0x570] sm:$0xff]
        %v405 = vld [vmem:[#allocation5 + $0x578] sm:$0xff]
        %v406 = vld [vmem:[#allocation5 + $0x580] sm:$0xff]
        %v407 = vld [vmem:[#allocation5 + $0x588] sm:$0xff]
        %v408 = vld [vmem:[#allocation5 + $0x590] sm:$0xff]
        %v409 = vld [vmem:[#allocation5 + $0x598] sm:$0xff]
        %v410 = vld [vmem:[#allocation5 + $0x5a0] sm:$0xff]
        %v411 = vld [vmem:[#allocation5 + $0x5a8] sm:$0xff]
        %v412 = vld [vmem:[#allocation5 + $0x5b0] sm:$0xff]
        %v413 = vld [vmem:[#allocation5 + $0x5b8] sm:$0xff]
        %v414 = vld [vmem:[#allocation5 + $0x5c0] sm:$0xff]
        %v415 = vld [vmem:[#allocation5 + $0x5c8] sm:$0xff]
        %v416 = vld [vmem:[#allocation5 + $0x5d0] sm:$0xff]
        %v417 = vld [vmem:[#allocation5 + $0x5d8] sm:$0xff]
        %v418 = vld [vmem:[#allocation5 + $0x5e0] sm:$0xff]
        %v419 = vld [vmem:[#allocation5 + $0x5e8] sm:$0xff]
        %v420 = vld [vmem:[#allocation5 + $0x5f0] sm:$0xff]
        %v421 = vld [vmem:[#allocation5 + $0x5f8] sm:$0xff]
        %v614 = vunpack.c.l.b16 %v230
        %v615 = vunpack.c.h.b16 %v230
        %v616 = vunpack.c.l.b16 %v231
        %v617 = vunpack.c.h.b16 %v231
        %v618 = vunpack.c.l.b16 %v232
        %v619 = vunpack.c.h.b16 %v232
        %v620 = vunpack.c.l.b16 %v233
        %v621 = vunpack.c.h.b16 %v233
        %v622 = vunpack.c.l.b16 %v234
        %v623 = vunpack.c.h.b16 %v234
        %v624 = vunpack.c.l.b16 %v235
        %v625 = vunpack.c.h.b16 %v235
        %v626 = vunpack.c.l.b16 %v236
        %v627 = vunpack.c.h.b16 %v236
        %v628 = vunpack.c.l.b16 %v237
        %v629 = vunpack.c.h.b16 %v237
        %v630 = vunpack.c.l.b16 %v238
        %v631 = vunpack.c.h.b16 %v238
        %v632 = vunpack.c.l.b16 %v239
        %v633 = vunpack.c.h.b16 %v239
        %v634 = vunpack.c.l.b16 %v240
        %v635 = vunpack.c.h.b16 %v240
        %v636 = vunpack.c.l.b16 %v241
        %v637 = vunpack.c.h.b16 %v241
        %v638 = vunpack.c.l.b16 %v242
        %v639 = vunpack.c.h.b16 %v242
        %v640 = vunpack.c.l.b16 %v243
        %v641 = vunpack.c.h.b16 %v243
        %v642 = vunpack.c.l.b16 %v244
        %v643 = vunpack.c.h.b16 %v244
        %v644 = vunpack.c.l.b16 %v245
        %v645 = vunpack.c.h.b16 %v245
        %v646 = vunpack.c.l.b16 %v246
        %v647 = vunpack.c.h.b16 %v246
        %v648 = vunpack.c.l.b16 %v247
        %v649 = vunpack.c.h.b16 %v247
        %v650 = vunpack.c.l.b16 %v248
        %v651 = vunpack.c.h.b16 %v248
        %v652 = vunpack.c.l.b16 %v249
        %v653 = vunpack.c.h.b16 %v249
        %v654 = vunpack.c.l.b16 %v250
        %v655 = vunpack.c.h.b16 %v250
        %v656 = vunpack.c.l.b16 %v251
        %v657 = vunpack.c.h.b16 %v251
        %v658 = vunpack.c.l.b16 %v252
        %v659 = vunpack.c.h.b16 %v252
        %v660 = vunpack.c.l.b16 %v253
        %v661 = vunpack.c.h.b16 %v253
        %v662 = vunpack.c.l.b16 %v254
        %v663 = vunpack.c.h.b16 %v254
        %v664 = vunpack.c.l.b16 %v255
        %v665 = vunpack.c.h.b16 %v255
        %v666 = vunpack.c.l.b16 %v256
        %v667 = vunpack.c.h.b16 %v256
        %v668 = vunpack.c.l.b16 %v257
        %v669 = vunpack.c.h.b16 %v257
        %v670 = vunpack.c.l.b16 %v258
        %v671 = vunpack.c.h.b16 %v258
        %v672 = vunpack.c.l.b16 %v259
        %v673 = vunpack.c.h.b16 %v259
        %v674 = vunpack.c.l.b16 %v260
        %v675 = vunpack.c.h.b16 %v260
        %v676 = vunpack.c.l.b16 %v261
        %v677 = vunpack.c.h.b16 %v261
        %v678 = vunpack.c.l.b16 %v262
        %v679 = vunpack.c.h.b16 %v262
        %v680 = vunpack.c.l.b16 %v263
        %v681 = vunpack.c.h.b16 %v263
        %v682 = vunpack.c.l.b16 %v264
        %v683 = vunpack.c.h.b16 %v264
        %v684 = vunpack.c.l.b16 %v265
        %v685 = vunpack.c.h.b16 %v265
        %v686 = vunpack.c.l.b16 %v266
        %v687 = vunpack.c.h.b16 %v266
        %v688 = vunpack.c.l.b16 %v267
        %v689 = vunpack.c.h.b16 %v267
        %v690 = vunpack.c.l.b16 %v268
        %v691 = vunpack.c.h.b16 %v268
        %v692 = vunpack.c.l.b16 %v269
        %v693 = vunpack.c.h.b16 %v269
        %v694 = vunpack.c.l.b16 %v270
        %v695 = vunpack.c.h.b16 %v270
        %v696 = vunpack.c.l.b16 %v271
        %v697 = vunpack.c.h.b16 %v271
        %v698 = vunpack.c.l.b16 %v272
        %v699 = vunpack.c.h.b16 %v272
        %v700 = vunpack.c.l.b16 %v273
        %v701 = vunpack.c.h.b16 %v273
        %v702 = vunpack.c.l.b16 %v274
        %v703 = vunpack.c.h.b16 %v274
        %v704 = vunpack.c.l.b16 %v275
        %v705 = vunpack.c.h.b16 %v275
        %v706 = vunpack.c.l.b16 %v276
        %v707 = vunpack.c.h.b16 %v276
        %v708 = vunpack.c.l.b16 %v277
        %v709 = vunpack.c.h.b16 %v277
        %v710 = vunpack.c.l.b16 %v278
        %v711 = vunpack.c.h.b16 %v278
        %v712 = vunpack.c.l.b16 %v279
        %v713 = vunpack.c.h.b16 %v279
        %v714 = vunpack.c.l.b16 %v280
        %v715 = vunpack.c.h.b16 %v280
        %v716 = vunpack.c.l.b16 %v281
        %v717 = vunpack.c.h.b16 %v281
        %v718 = vunpack.c.l.b16 %v282
        %v719 = vunpack.c.h.b16 %v282
        %v720 = vunpack.c.l.b16 %v283
        %v721 = vunpack.c.h.b16 %v283
        %v722 = vunpack.c.l.b16 %v284
        %v723 = vunpack.c.h.b16 %v284
        %v724 = vunpack.c.l.b16 %v285
        %v725 = vunpack.c.h.b16 %v285
        %v726 = vunpack.c.l.b16 %v286
        %v727 = vunpack.c.h.b16 %v286
        %v728 = vunpack.c.l.b16 %v287
        %v729 = vunpack.c.h.b16 %v287
        %v730 = vunpack.c.l.b16 %v288
        %v731 = vunpack.c.h.b16 %v288
        %v732 = vunpack.c.l.b16 %v289
        %v733 = vunpack.c.h.b16 %v289
        %v734 = vunpack.c.l.b16 %v290
        %v735 = vunpack.c.h.b16 %v290
        %v736 = vunpack.c.l.b16 %v291
        %v737 = vunpack.c.h.b16 %v291
        %v738 = vunpack.c.l.b16 %v292
        %v739 = vunpack.c.h.b16 %v292
        %v740 = vunpack.c.l.b16 %v293
        %v741 = vunpack.c.h.b16 %v293
        %v742 = vunpack.c.l.b16 %v294
        %v743 = vunpack.c.h.b16 %v294
        %v744 = vunpack.c.l.b16 %v295
        %v745 = vunpack.c.h.b16 %v295
        %v746 = vunpack.c.l.b16 %v296
        %v747 = vunpack.c.h.b16 %v296
        %v748 = vunpack.c.l.b16 %v297
        %v749 = vunpack.c.h.b16 %v297
        %v750 = vunpack.c.l.b16 %v298
        %v751 = vunpack.c.h.b16 %v298
        %v752 = vunpack.c.l.b16 %v299
        %v753 = vunpack.c.h.b16 %v299
        %v754 = vunpack.c.l.b16 %v300
        %v755 = vunpack.c.h.b16 %v300
        %v756 = vunpack.c.l.b16 %v301
        %v757 = vunpack.c.h.b16 %v301
        %v758 = vunpack.c.l.b16 %v302
        %v759 = vunpack.c.h.b16 %v302
        %v760 = vunpack.c.l.b16 %v303
        %v761 = vunpack.c.h.b16 %v303
        %v762 = vunpack.c.l.b16 %v304
        %v763 = vunpack.c.h.b16 %v304
        %v764 = vunpack.c.l.b16 %v305
        %v765 = vunpack.c.h.b16 %v305
        %v766 = vunpack.c.l.b16 %v306
        %v767 = vunpack.c.h.b16 %v306
        %v768 = vunpack.c.l.b16 %v307
        %v769 = vunpack.c.h.b16 %v307
        %v770 = vunpack.c.l.b16 %v308
        %v771 = vunpack.c.h.b16 %v308
        %v772 = vunpack.c.l.b16 %v309
        %v773 = vunpack.c.h.b16 %v309
        %v774 = vunpack.c.l.b16 %v310
        %v775 = vunpack.c.h.b16 %v310
        %v776 = vunpack.c.l.b16 %v311
        %v777 = vunpack.c.h.b16 %v311
        %v778 = vunpack.c.l.b16 %v312
        %v779 = vunpack.c.h.b16 %v312
        %v780 = vunpack.c.l.b16 %v313
        %v781 = vunpack.c.h.b16 %v313
        %v782 = vunpack.c.l.b16 %v314
        %v783 = vunpack.c.h.b16 %v314
        %v784 = vunpack.c.l.b16 %v315
        %v785 = vunpack.c.h.b16 %v315
        %v786 = vunpack.c.l.b16 %v316
        %v787 = vunpack.c.h.b16 %v316
        %v788 = vunpack.c.l.b16 %v317
        %v789 = vunpack.c.h.b16 %v317
        %v790 = vunpack.c.l.b16 %v318
        %v791 = vunpack.c.h.b16 %v318
        %v792 = vunpack.c.l.b16 %v319
        %v793 = vunpack.c.h.b16 %v319
        %v794 = vunpack.c.l.b16 %v320
        %v795 = vunpack.c.h.b16 %v320
        %v796 = vunpack.c.l.b16 %v321
        %v797 = vunpack.c.h.b16 %v321
        %v798 = vunpack.c.l.b16 %v322
        %v799 = vunpack.c.h.b16 %v322
        %v800 = vunpack.c.l.b16 %v323
        %v801 = vunpack.c.h.b16 %v323
        %v802 = vunpack.c.l.b16 %v324
        %v803 = vunpack.c.h.b16 %v324
        %v804 = vunpack.c.l.b16 %v325
        %v805 = vunpack.c.h.b16 %v325
        %v806 = vunpack.c.l.b16 %v326
        %v807 = vunpack.c.h.b16 %v326
        %v808 = vunpack.c.l.b16 %v327
        %v809 = vunpack.c.h.b16 %v327
        %v810 = vunpack.c.l.b16 %v328
        %v811 = vunpack.c.h.b16 %v328
        %v812 = vunpack.c.l.b16 %v329
        %v813 = vunpack.c.h.b16 %v329
        %v814 = vunpack.c.l.b16 %v330
        %v815 = vunpack.c.h.b16 %v330
        %v816 = vunpack.c.l.b16 %v331
        %v817 = vunpack.c.h.b16 %v331
        %v818 = vunpack.c.l.b16 %v332
        %v819 = vunpack.c.h.b16 %v332
        %v820 = vunpack.c.l.b16 %v333
        %v821 = vunpack.c.h.b16 %v333
        %v822 = vunpack.c.l.b16 %v334
        %v823 = vunpack.c.h.b16 %v334
        %v824 = vunpack.c.l.b16 %v335
        %v825 = vunpack.c.h.b16 %v335
        %v826 = vunpack.c.l.b16 %v336
        %v827 = vunpack.c.h.b16 %v336
        %v828 = vunpack.c.l.b16 %v337
        %v829 = vunpack.c.h.b16 %v337
        %v830 = vunpack.c.l.b16 %v338
        %v831 = vunpack.c.h.b16 %v338
        %v832 = vunpack.c.l.b16 %v339
        %v833 = vunpack.c.h.b16 %v339
        %v834 = vunpack.c.l.b16 %v340
        %v835 = vunpack.c.h.b16 %v340
        %v836 = vunpack.c.l.b16 %v341
        %v837 = vunpack.c.h.b16 %v341
        %v838 = vunpack.c.l.b16 %v342
        %v839 = vunpack.c.h.b16 %v342
        %v840 = vunpack.c.l.b16 %v343
        %v841 = vunpack.c.h.b16 %v343
        %v842 = vunpack.c.l.b16 %v344
        %v843 = vunpack.c.h.b16 %v344
        %v844 = vunpack.c.l.b16 %v345
        %v845 = vunpack.c.h.b16 %v345
        %v846 = vunpack.c.l.b16 %v346
        %v847 = vunpack.c.h.b16 %v346
        %v848 = vunpack.c.l.b16 %v347
        %v849 = vunpack.c.h.b16 %v347
        %v850 = vunpack.c.l.b16 %v348
        %v851 = vunpack.c.h.b16 %v348
        %v852 = vunpack.c.l.b16 %v349
        %v853 = vunpack.c.h.b16 %v349
        %v854 = vunpack.c.l.b16 %v350
        %v855 = vunpack.c.h.b16 %v350
        %v856 = vunpack.c.l.b16 %v351
        %v857 = vunpack.c.h.b16 %v351
        %v858 = vunpack.c.l.b16 %v352
        %v859 = vunpack.c.h.b16 %v352
        %v860 = vunpack.c.l.b16 %v353
        %v861 = vunpack.c.h.b16 %v353
        %v862 = vunpack.c.l.b16 %v354
        %v863 = vunpack.c.h.b16 %v354
        %v864 = vunpack.c.l.b16 %v355
        %v865 = vunpack.c.h.b16 %v355
        %v866 = vunpack.c.l.b16 %v356
        %v867 = vunpack.c.h.b16 %v356
        %v868 = vunpack.c.l.b16 %v357
        %v869 = vunpack.c.h.b16 %v357
        %v870 = vunpack.c.l.b16 %v358
        %v871 = vunpack.c.h.b16 %v358
        %v872 = vunpack.c.l.b16 %v359
        %v873 = vunpack.c.h.b16 %v359
        %v874 = vunpack.c.l.b16 %v360
        %v875 = vunpack.c.h.b16 %v360
        %v876 = vunpack.c.l.b16 %v361
        %v877 = vunpack.c.h.b16 %v361
        %v878 = vunpack.c.l.b16 %v362
        %v879 = vunpack.c.h.b16 %v362
        %v880 = vunpack.c.l.b16 %v363
        %v881 = vunpack.c.h.b16 %v363
        %v882 = vunpack.c.l.b16 %v364
        %v883 = vunpack.c.h.b16 %v364
        %v884 = vunpack.c.l.b16 %v365
        %v885 = vunpack.c.h.b16 %v365
        %v886 = vunpack.c.l.b16 %v366
        %v887 = vunpack.c.h.b16 %v366
        %v888 = vunpack.c.l.b16 %v367
        %v889 = vunpack.c.h.b16 %v367
        %v890 = vunpack.c.l.b16 %v368
        %v891 = vunpack.c.h.b16 %v368
        %v892 = vunpack.c.l.b16 %v369
        %v893 = vunpack.c.h.b16 %v369
        %v894 = vunpack.c.l.b16 %v370
        %v895 = vunpack.c.h.b16 %v370
        %v896 = vunpack.c.l.b16 %v371
        %v897 = vunpack.c.h.b16 %v371
        %v898 = vunpack.c.l.b16 %v372
        %v899 = vunpack.c.h.b16 %v372
        %v900 = vunpack.c.l.b16 %v373
        %v901 = vunpack.c.h.b16 %v373
        %v902 = vunpack.c.l.b16 %v374
        %v903 = vunpack.c.h.b16 %v374
        %v904 = vunpack.c.l.b16 %v375
        %v905 = vunpack.c.h.b16 %v375
        %v906 = vunpack.c.l.b16 %v376
        %v907 = vunpack.c.h.b16 %v376
        %v908 = vunpack.c.l.b16 %v377
        %v909 = vunpack.c.h.b16 %v377
        %v910 = vunpack.c.l.b16 %v378
        %v911 = vunpack.c.h.b16 %v378
        %v912 = vunpack.c.l.b16 %v379
        %v913 = vunpack.c.h.b16 %v379
        %v914 = vunpack.c.l.b16 %v380
        %v915 = vunpack.c.h.b16 %v380
        %v916 = vunpack.c.l.b16 %v381
        %v917 = vunpack.c.h.b16 %v381
        %v918 = vunpack.c.l.b16 %v382
        %v919 = vunpack.c.h.b16 %v382
        %v920 = vunpack.c.l.b16 %v383
        %v921 = vunpack.c.h.b16 %v383
        %v922 = vunpack.c.l.b16 %v384
        %v923 = vunpack.c.h.b16 %v384
        %v924 = vunpack.c.l.b16 %v385
        %v925 = vunpack.c.h.b16 %v385
        %v926 = vunpack.c.l.b16 %v386
        %v927 = vunpack.c.h.b16 %v386
        %v928 = vunpack.c.l.b16 %v387
        %v929 = vunpack.c.h.b16 %v387
        %v930 = vunpack.c.l.b16 %v388
        %v931 = vunpack.c.h.b16 %v388
        %v932 = vunpack.c.l.b16 %v389
        %v933 = vunpack.c.h.b16 %v389
        %v934 = vunpack.c.l.b16 %v390
        %v935 = vunpack.c.h.b16 %v390
        %v936 = vunpack.c.l.b16 %v391
        %v937 = vunpack.c.h.b16 %v391
        %v938 = vunpack.c.l.b16 %v392
        %v939 = vunpack.c.h.b16 %v392
        %v940 = vunpack.c.l.b16 %v393
        %v941 = vunpack.c.h.b16 %v393
        %v942 = vunpack.c.l.b16 %v394
        %v943 = vunpack.c.h.b16 %v394
        %v944 = vunpack.c.l.b16 %v395
        %v945 = vunpack.c.h.b16 %v395
        %v946 = vunpack.c.l.b16 %v396
        %v947 = vunpack.c.h.b16 %v396
        %v948 = vunpack.c.l.b16 %v397
        %v949 = vunpack.c.h.b16 %v397
        %v950 = vunpack.c.l.b16 %v398
        %v951 = vunpack.c.h.b16 %v398
        %v952 = vunpack.c.l.b16 %v399
        %v953 = vunpack.c.h.b16 %v399
        %v954 = vunpack.c.l.b16 %v400
        %v955 = vunpack.c.h.b16 %v400
        %v956 = vunpack.c.l.b16 %v401
        %v957 = vunpack.c.h.b16 %v401
        %v958 = vunpack.c.l.b16 %v402
        %v959 = vunpack.c.h.b16 %v402
        %v960 = vunpack.c.l.b16 %v403
        %v961 = vunpack.c.h.b16 %v403
        %v962 = vunpack.c.l.b16 %v404
        %v963 = vunpack.c.h.b16 %v404
        %v964 = vunpack.c.l.b16 %v405
        %v965 = vunpack.c.h.b16 %v405
        %v966 = vunpack.c.l.b16 %v406
        %v967 = vunpack.c.h.b16 %v406
        %v968 = vunpack.c.l.b16 %v407
        %v969 = vunpack.c.h.b16 %v407
        %v970 = vunpack.c.l.b16 %v408
        %v971 = vunpack.c.h.b16 %v408
        %v972 = vunpack.c.l.b16 %v409
        %v973 = vunpack.c.h.b16 %v409
        %v974 = vunpack.c.l.b16 %v410
        %v975 = vunpack.c.h.b16 %v410
        %v976 = vunpack.c.l.b16 %v411
        %v977 = vunpack.c.h.b16 %v411
        %v978 = vunpack.c.l.b16 %v412
        %v979 = vunpack.c.h.b16 %v412
        %v980 = vunpack.c.l.b16 %v413
        %v981 = vunpack.c.h.b16 %v413
        %v982 = vunpack.c.l.b16 %v414
        %v983 = vunpack.c.h.b16 %v414
        %v984 = vunpack.c.l.b16 %v415
        %v985 = vunpack.c.h.b16 %v415
        %v986 = vunpack.c.l.b16 %v416
        %v987 = vunpack.c.h.b16 %v416
        %v988 = vunpack.c.l.b16 %v417
        %v989 = vunpack.c.h.b16 %v417
        %v990 = vunpack.c.l.b16 %v418
        %v991 = vunpack.c.h.b16 %v418
        %v992 = vunpack.c.l.b16 %v419
        %v993 = vunpack.c.h.b16 %v419
        %v994 = vunpack.c.l.b16 %v420
        %v995 = vunpack.c.h.b16 %v420
        %v996 = vunpack.c.l.b16 %v421
        %v997 = vunpack.c.h.b16 %v421
        %v998 = vpack.c.b16 %v622, %v614
        %v999 = vpack.c.b16 %v623, %v615
        %v1000 = vpack.c.b16 %v624, %v616
        %v1001 = vpack.c.b16 %v625, %v617
        %v1002 = vpack.c.b16 %v626, %v618
        %v1003 = vpack.c.b16 %v627, %v619
        %v1004 = vpack.c.b16 %v628, %v620
        %v1005 = vpack.c.b16 %v629, %v621
        %v1006 = vpack.c.b16 %v638, %v630
        %v1007 = vpack.c.b16 %v639, %v631
        %v1008 = vpack.c.b16 %v640, %v632
        %v1009 = vpack.c.b16 %v641, %v633
        %v1010 = vpack.c.b16 %v642, %v634
        %v1011 = vpack.c.b16 %v643, %v635
        %v1012 = vpack.c.b16 %v644, %v636
        %v1013 = vpack.c.b16 %v645, %v637
        %v1014 = vpack.c.b16 %v654, %v646
        %v1015 = vpack.c.b16 %v655, %v647
        %v1016 = vpack.c.b16 %v656, %v648
        %v1017 = vpack.c.b16 %v657, %v649
        %v1018 = vpack.c.b16 %v658, %v650
        %v1019 = vpack.c.b16 %v659, %v651
        %v1020 = vpack.c.b16 %v660, %v652
        %v1021 = vpack.c.b16 %v661, %v653
        %v1022 = vpack.c.b16 %v670, %v662
        %v1023 = vpack.c.b16 %v671, %v663
        %v1024 = vpack.c.b16 %v672, %v664
        %v1025 = vpack.c.b16 %v673, %v665
        %v1026 = vpack.c.b16 %v674, %v666
        %v1027 = vpack.c.b16 %v675, %v667
        %v1028 = vpack.c.b16 %v676, %v668
        %v1029 = vpack.c.b16 %v677, %v669
        %v1030 = vpack.c.b16 %v686, %v678
        %v1031 = vpack.c.b16 %v687, %v679
        %v1032 = vpack.c.b16 %v688, %v680
        %v1033 = vpack.c.b16 %v689, %v681
        %v1034 = vpack.c.b16 %v690, %v682
        %v1035 = vpack.c.b16 %v691, %v683
        %v1036 = vpack.c.b16 %v692, %v684
        %v1037 = vpack.c.b16 %v693, %v685
        %v1038 = vpack.c.b16 %v702, %v694
        %v1039 = vpack.c.b16 %v703, %v695
        %v1040 = vpack.c.b16 %v704, %v696
        %v1041 = vpack.c.b16 %v705, %v697
        %v1042 = vpack.c.b16 %v706, %v698
        %v1043 = vpack.c.b16 %v707, %v699
        %v1044 = vpack.c.b16 %v708, %v700
        %v1045 = vpack.c.b16 %v709, %v701
        %v1046 = vpack.c.b16 %v718, %v710
        %v1047 = vpack.c.b16 %v719, %v711
        %v1048 = vpack.c.b16 %v720, %v712
        %v1049 = vpack.c.b16 %v721, %v713
        %v1050 = vpack.c.b16 %v722, %v714
        %v1051 = vpack.c.b16 %v723, %v715
        %v1052 = vpack.c.b16 %v724, %v716
        %v1053 = vpack.c.b16 %v725, %v717
        %v1054 = vpack.c.b16 %v734, %v726
        %v1055 = vpack.c.b16 %v735, %v727
        %v1056 = vpack.c.b16 %v736, %v728
        %v1057 = vpack.c.b16 %v737, %v729
        %v1058 = vpack.c.b16 %v738, %v730
        %v1059 = vpack.c.b16 %v739, %v731
        %v1060 = vpack.c.b16 %v740, %v732
        %v1061 = vpack.c.b16 %v741, %v733
        %v1062 = vpack.c.b16 %v750, %v742
        %v1063 = vpack.c.b16 %v751, %v743
        %v1064 = vpack.c.b16 %v752, %v744
        %v1065 = vpack.c.b16 %v753, %v745
        %v1066 = vpack.c.b16 %v754, %v746
        %v1067 = vpack.c.b16 %v755, %v747
        %v1068 = vpack.c.b16 %v756, %v748
        %v1069 = vpack.c.b16 %v757, %v749
        %v1070 = vpack.c.b16 %v766, %v758
        %v1071 = vpack.c.b16 %v767, %v759
        %v1072 = vpack.c.b16 %v768, %v760
        %v1073 = vpack.c.b16 %v769, %v761
        %v1074 = vpack.c.b16 %v770, %v762
        %v1075 = vpack.c.b16 %v771, %v763
        %v1076 = vpack.c.b16 %v772, %v764
        %v1077 = vpack.c.b16 %v773, %v765
        %v1078 = vpack.c.b16 %v782, %v774
        %v1079 = vpack.c.b16 %v783, %v775
        %v1080 = vpack.c.b16 %v784, %v776
        %v1081 = vpack.c.b16 %v785, %v777
        %v1082 = vpack.c.b16 %v786, %v778
        %v1083 = vpack.c.b16 %v787, %v779
        %v1084 = vpack.c.b16 %v788, %v780
        %v1085 = vpack.c.b16 %v789, %v781
        %v1086 = vpack.c.b16 %v798, %v790
        %v1087 = vpack.c.b16 %v799, %v791
        %v1088 = vpack.c.b16 %v800, %v792
        %v1089 = vpack.c.b16 %v801, %v793
        %v1090 = vpack.c.b16 %v802, %v794
        %v1091 = vpack.c.b16 %v803, %v795
        %v1092 = vpack.c.b16 %v804, %v796
        %v1093 = vpack.c.b16 %v805, %v797
        %v1094 = vpack.c.b16 %v814, %v806
        %v1095 = vpack.c.b16 %v815, %v807
        %v1096 = vpack.c.b16 %v816, %v808
        %v1097 = vpack.c.b16 %v817, %v809
        %v1098 = vpack.c.b16 %v818, %v810
        %v1099 = vpack.c.b16 %v819, %v811
        %v1100 = vpack.c.b16 %v820, %v812
        %v1101 = vpack.c.b16 %v821, %v813
        %v1102 = vpack.c.b16 %v830, %v822
        %v1103 = vpack.c.b16 %v831, %v823
        %v1104 = vpack.c.b16 %v832, %v824
        %v1105 = vpack.c.b16 %v833, %v825
        %v1106 = vpack.c.b16 %v834, %v826
        %v1107 = vpack.c.b16 %v835, %v827
        %v1108 = vpack.c.b16 %v836, %v828
        %v1109 = vpack.c.b16 %v837, %v829
        %v1110 = vpack.c.b16 %v846, %v838
        %v1111 = vpack.c.b16 %v847, %v839
        %v1112 = vpack.c.b16 %v848, %v840
        %v1113 = vpack.c.b16 %v849, %v841
        %v1114 = vpack.c.b16 %v850, %v842
        %v1115 = vpack.c.b16 %v851, %v843
        %v1116 = vpack.c.b16 %v852, %v844
        %v1117 = vpack.c.b16 %v853, %v845
        %v1118 = vpack.c.b16 %v862, %v854
        %v1119 = vpack.c.b16 %v863, %v855
        %v1120 = vpack.c.b16 %v864, %v856
        %v1121 = vpack.c.b16 %v865, %v857
        %v1122 = vpack.c.b16 %v866, %v858
        %v1123 = vpack.c.b16 %v867, %v859
        %v1124 = vpack.c.b16 %v868, %v860
        %v1125 = vpack.c.b16 %v869, %v861
        %v1126 = vpack.c.b16 %v878, %v870
        %v1127 = vpack.c.b16 %v879, %v871
        %v1128 = vpack.c.b16 %v880, %v872
        %v1129 = vpack.c.b16 %v881, %v873
        %v1130 = vpack.c.b16 %v882, %v874
        %v1131 = vpack.c.b16 %v883, %v875
        %v1132 = vpack.c.b16 %v884, %v876
        %v1133 = vpack.c.b16 %v885, %v877
        %v1134 = vpack.c.b16 %v894, %v886
        %v1135 = vpack.c.b16 %v895, %v887
        %v1136 = vpack.c.b16 %v896, %v888
        %v1137 = vpack.c.b16 %v897, %v889
        %v1138 = vpack.c.b16 %v898, %v890
        %v1139 = vpack.c.b16 %v899, %v891
        %v1140 = vpack.c.b16 %v900, %v892
        %v1141 = vpack.c.b16 %v901, %v893
        %v1142 = vpack.c.b16 %v910, %v902
        %v1143 = vpack.c.b16 %v911, %v903
        %v1144 = vpack.c.b16 %v912, %v904
        %v1145 = vpack.c.b16 %v913, %v905
        %v1146 = vpack.c.b16 %v914, %v906
        %v1147 = vpack.c.b16 %v915, %v907
        %v1148 = vpack.c.b16 %v916, %v908
        %v1149 = vpack.c.b16 %v917, %v909
        %v1150 = vpack.c.b16 %v926, %v918
        %v1151 = vpack.c.b16 %v927, %v919
        %v1152 = vpack.c.b16 %v928, %v920
        %v1153 = vpack.c.b16 %v929, %v921
        %v1154 = vpack.c.b16 %v930, %v922
        %v1155 = vpack.c.b16 %v931, %v923
        %v1156 = vpack.c.b16 %v932, %v924
        %v1157 = vpack.c.b16 %v933, %v925
        %v1158 = vpack.c.b16 %v942, %v934
        %v1159 = vpack.c.b16 %v943, %v935
        %v1160 = vpack.c.b16 %v944, %v936
        %v1161 = vpack.c.b16 %v945, %v937
        %v1162 = vpack.c.b16 %v946, %v938
        %v1163 = vpack.c.b16 %v947, %v939
        %v1164 = vpack.c.b16 %v948, %v940
        %v1165 = vpack.c.b16 %v949, %v941
        %v1166 = vpack.c.b16 %v958, %v950
        %v1167 = vpack.c.b16 %v959, %v951
        %v1168 = vpack.c.b16 %v960, %v952
        %v1169 = vpack.c.b16 %v961, %v953
        %v1170 = vpack.c.b16 %v962, %v954
        %v1171 = vpack.c.b16 %v963, %v955
        %v1172 = vpack.c.b16 %v964, %v956
        %v1173 = vpack.c.b16 %v965, %v957
        %v1174 = vpack.c.b16 %v974, %v966
        %v1175 = vpack.c.b16 %v975, %v967
        %v1176 = vpack.c.b16 %v976, %v968
        %v1177 = vpack.c.b16 %v977, %v969
        %v1178 = vpack.c.b16 %v978, %v970
        %v1179 = vpack.c.b16 %v979, %v971
        %v1180 = vpack.c.b16 %v980, %v972
        %v1181 = vpack.c.b16 %v981, %v973
        %v1182 = vpack.c.b16 %v990, %v982
        %v1183 = vpack.c.b16 %v991, %v983
        %v1184 = vpack.c.b16 %v992, %v984
        %v1185 = vpack.c.b16 %v993, %v985
        %v1186 = vpack.c.b16 %v994, %v986
        %v1187 = vpack.c.b16 %v995, %v987
        %v1188 = vpack.c.b16 %v996, %v988
        %v1189 = vpack.c.b16 %v997, %v989
        %1382 = vmatpush.bf16.msra.mxu0 %v1054
        %1383 = vmatpush.bf16.msra.mxu0 %v1046
        %1384 = vmatpush.bf16.msra.mxu0 %v1038
        %1385 = vmatpush.bf16.msra.mxu0 %v1030
        %1386 = vmatpush.bf16.msra.mxu0 %v1022
        %1387 = vmatpush.bf16.msra.mxu0 %v1014
        %1388 = vmatpush.bf16.msra.mxu0 %v1006
        %1389 = vmatpush.bf16.msra.mxu0 %v998
        %1390 = vmatmul.bf16.gmra.mxu0 %v223
        %v1391 = vpop.f32.mrf.mxu0
        %v1392 = vadd.f32 0.0, %v1391
        %v1393 = vpop.f32.mrf.mxu0
        %1394 = vdwg.mxu0
        %1395 = vmatpush.bf16.msra.mxu0 %v1118
        %1396 = vmatpush.bf16.msra.mxu0 %v1110
        %1397 = vmatpush.bf16.msra.mxu0 %v1102
        %1398 = vmatpush.bf16.msra.mxu0 %v1094
        %1399 = vmatpush.bf16.msra.mxu0 %v1086
        %1400 = vmatpush.bf16.msra.mxu0 %v1078
        %1401 = vmatpush.bf16.msra.mxu0 %v1070
        %1402 = vmatpush.bf16.msra.mxu0 %v1062
        %1403 = vmatmul.bf16.gmra.mxu0 %v226
        %v1404 = vpop.f32.mrf.mxu0
        %v1405 = vadd.f32 %v1392, %v1404
        %v1406 = vpop.f32.mrf.mxu0
        %1407 = vdwg.mxu0
        %1408 = vmatpush.bf16.msra.mxu0 %v1182
        %1409 = vmatpush.bf16.msra.mxu0 %v1174
        %1410 = vmatpush.bf16.msra.mxu0 %v1166
        %1411 = vmatpush.bf16.msra.mxu0 %v1158
        %1412 = vmatpush.bf16.msra.mxu0 %v1150
        %1413 = vmatpush.bf16.msra.mxu0 %v1142
        %1414 = vmatpush.bf16.msra.mxu0 %v1134
        %1415 = vmatpush.bf16.msra.mxu0 %v1126
        %1416 = vmatmul.bf16.gmra.mxu0 %v229
        %v1417 = vpop.f32.mrf.mxu0
        %v1418 = vadd.f32 %v1405, %v1417
        %v1419 = vpop.f32.mrf.mxu0
        %1420 = vdwg.mxu0
        %1421 = vmatpush.bf16.msra.mxu0 %v1055
        %1422 = vmatpush.bf16.msra.mxu0 %v1047
        %1423 = vmatpush.bf16.msra.mxu0 %v1039
        %1424 = vmatpush.bf16.msra.mxu0 %v1031
        %1425 = vmatpush.bf16.msra.mxu0 %v1023
        %1426 = vmatpush.bf16.msra.mxu0 %v1015
        %1427 = vmatpush.bf16.msra.mxu0 %v1007
        %1428 = vmatpush.bf16.msra.mxu0 %v999
        %1429 = vmatmul.bf16.gmra.mxu0 %v223
        %v1430 = vpop.f32.mrf.mxu0
        %v1431 = vadd.f32 0.0, %v1430
        %v1432 = vpop.f32.mrf.mxu0
        %1433 = vdwg.mxu0
        %1434 = vmatpush.bf16.msra.mxu0 %v1119
        %1435 = vmatpush.bf16.msra.mxu0 %v1111
        %1436 = vmatpush.bf16.msra.mxu0 %v1103
        %1437 = vmatpush.bf16.msra.mxu0 %v1095
        %1438 = vmatpush.bf16.msra.mxu0 %v1087
        %1439 = vmatpush.bf16.msra.mxu0 %v1079
        %1440 = vmatpush.bf16.msra.mxu0 %v1071
        %1441 = vmatpush.bf16.msra.mxu0 %v1063
        %1442 = vmatmul.bf16.gmra.mxu0 %v226
        %v1443 = vpop.f32.mrf.mxu0
        %v1444 = vadd.f32 %v1431, %v1443
        %v1445 = vpop.f32.mrf.mxu0
        %1446 = vdwg.mxu0
        %1447 = vmatpush.bf16.msra.mxu0 %v1183
        %1448 = vmatpush.bf16.msra.mxu0 %v1175
        %1449 = vmatpush.bf16.msra.mxu0 %v1167
        %1450 = vmatpush.bf16.msra.mxu0 %v1159
        %1451 = vmatpush.bf16.msra.mxu0 %v1151
        %1452 = vmatpush.bf16.msra.mxu0 %v1143
        %1453 = vmatpush.bf16.msra.mxu0 %v1135
        %1454 = vmatpush.bf16.msra.mxu0 %v1127
        %1455 = vmatmul.bf16.gmra.mxu0 %v229
        %v1456 = vpop.f32.mrf.mxu0
        %v1457 = vadd.f32 %v1444, %v1456
        %v1458 = vpop.f32.mrf.mxu0
        %1459 = vdwg.mxu0
        %1460 = vmatpush.bf16.msra.mxu0 %v1056
        %1461 = vmatpush.bf16.msra.mxu0 %v1048
        %1462 = vmatpush.bf16.msra.mxu0 %v1040
        %1463 = vmatpush.bf16.msra.mxu0 %v1032
        %1464 = vmatpush.bf16.msra.mxu0 %v1024
        %1465 = vmatpush.bf16.msra.mxu0 %v1016
        %1466 = vmatpush.bf16.msra.mxu0 %v1008
        %1467 = vmatpush.bf16.msra.mxu0 %v1000
        %1468 = vmatmul.bf16.gmra.mxu0 %v223
        %v1469 = vpop.f32.mrf.mxu0
        %v1470 = vadd.f32 0.0, %v1469
        %v1471 = vpop.f32.mrf.mxu0
        %1472 = vdwg.mxu0
        %1473 = vmatpush.bf16.msra.mxu0 %v1120
        %1474 = vmatpush.bf16.msra.mxu0 %v1112
        %1475 = vmatpush.bf16.msra.mxu0 %v1104
        %1476 = vmatpush.bf16.msra.mxu0 %v1096
        %1477 = vmatpush.bf16.msra.mxu0 %v1088
        %1478 = vmatpush.bf16.msra.mxu0 %v1080
        %1479 = vmatpush.bf16.msra.mxu0 %v1072
        %1480 = vmatpush.bf16.msra.mxu0 %v1064
        %1481 = vmatmul.bf16.gmra.mxu0 %v226
        %v1482 = vpop.f32.mrf.mxu0
        %v1483 = vadd.f32 %v1470, %v1482
        %v1484 = vpop.f32.mrf.mxu0
        %1485 = vdwg.mxu0
        %1486 = vmatpush.bf16.msra.mxu0 %v1184
        %1487 = vmatpush.bf16.msra.mxu0 %v1176
        %1488 = vmatpush.bf16.msra.mxu0 %v1168
        %1489 = vmatpush.bf16.msra.mxu0 %v1160
        %1490 = vmatpush.bf16.msra.mxu0 %v1152
        %1491 = vmatpush.bf16.msra.mxu0 %v1144
        %1492 = vmatpush.bf16.msra.mxu0 %v1136
        %1493 = vmatpush.bf16.msra.mxu0 %v1128
        %1494 = vmatmul.bf16.gmra.mxu0 %v229
        %v1495 = vpop.f32.mrf.mxu0
        %v1496 = vadd.f32 %v1483, %v1495
        %v1497 = vpop.f32.mrf.mxu0
        %1498 = vdwg.mxu0
        %1499 = vmatpush.bf16.msra.mxu0 %v1057
        %1500 = vmatpush.bf16.msra.mxu0 %v1049
        %1501 = vmatpush.bf16.msra.mxu0 %v1041
        %1502 = vmatpush.bf16.msra.mxu0 %v1033
        %1503 = vmatpush.bf16.msra.mxu0 %v1025
        %1504 = vmatpush.bf16.msra.mxu0 %v1017
        %1505 = vmatpush.bf16.msra.mxu0 %v1009
        %1506 = vmatpush.bf16.msra.mxu0 %v1001
        %1507 = vmatmul.bf16.gmra.mxu0 %v223
        %v1508 = vpop.f32.mrf.mxu0
        %v1509 = vadd.f32 0.0, %v1508
        %v1510 = vpop.f32.mrf.mxu0
        %1511 = vdwg.mxu0
        %1512 = vmatpush.bf16.msra.mxu0 %v1121
        %1513 = vmatpush.bf16.msra.mxu0 %v1113
        %1514 = vmatpush.bf16.msra.mxu0 %v1105
        %1515 = vmatpush.bf16.msra.mxu0 %v1097
        %1516 = vmatpush.bf16.msra.mxu0 %v1089
        %1517 = vmatpush.bf16.msra.mxu0 %v1081
        %1518 = vmatpush.bf16.msra.mxu0 %v1073
        %1519 = vmatpush.bf16.msra.mxu0 %v1065
        %1520 = vmatmul.bf16.gmra.mxu0 %v226
        %v1521 = vpop.f32.mrf.mxu0
        %v1522 = vadd.f32 %v1509, %v1521
        %v1523 = vpop.f32.mrf.mxu0
        %1524 = vdwg.mxu0
        %1525 = vmatpush.bf16.msra.mxu0 %v1185
        %1526 = vmatpush.bf16.msra.mxu0 %v1177
        %1527 = vmatpush.bf16.msra.mxu0 %v1169
        %1528 = vmatpush.bf16.msra.mxu0 %v1161
        %1529 = vmatpush.bf16.msra.mxu0 %v1153
        %1530 = vmatpush.bf16.msra.mxu0 %v1145
        %1531 = vmatpush.bf16.msra.mxu0 %v1137
        %1532 = vmatpush.bf16.msra.mxu0 %v1129
        %1533 = vmatmul.bf16.gmra.mxu0 %v229
        %v1534 = vpop.f32.mrf.mxu0
        %v1535 = vadd.f32 %v1522, %v1534
        %v1536 = vpop.f32.mrf.mxu0
        %1537 = vdwg.mxu0
        %1538 = vmatpush.bf16.msra.mxu0 %v1058
        %1539 = vmatpush.bf16.msra.mxu0 %v1050
        %1540 = vmatpush.bf16.msra.mxu0 %v1042
        %1541 = vmatpush.bf16.msra.mxu0 %v1034
        %1542 = vmatpush.bf16.msra.mxu0 %v1026
        %1543 = vmatpush.bf16.msra.mxu0 %v1018
        %1544 = vmatpush.bf16.msra.mxu0 %v1010
        %1545 = vmatpush.bf16.msra.mxu0 %v1002
        %1546 = vmatmul.bf16.gmra.mxu0 %v223
        %v1547 = vpop.f32.mrf.mxu0
        %v1548 = vadd.f32 0.0, %v1547
        %v1549 = vpop.f32.mrf.mxu0
        %1550 = vdwg.mxu0
        %1551 = vmatpush.bf16.msra.mxu0 %v1122
        %1552 = vmatpush.bf16.msra.mxu0 %v1114
        %1553 = vmatpush.bf16.msra.mxu0 %v1106
        %1554 = vmatpush.bf16.msra.mxu0 %v1098
        %1555 = vmatpush.bf16.msra.mxu0 %v1090
        %1556 = vmatpush.bf16.msra.mxu0 %v1082
        %1557 = vmatpush.bf16.msra.mxu0 %v1074
        %1558 = vmatpush.bf16.msra.mxu0 %v1066
        %1559 = vmatmul.bf16.gmra.mxu0 %v226
        %v1560 = vpop.f32.mrf.mxu0
        %v1561 = vadd.f32 %v1548, %v1560
        %v1562 = vpop.f32.mrf.mxu0
        %1563 = vdwg.mxu0
        %1564 = vmatpush.bf16.msra.mxu0 %v1186
        %1565 = vmatpush.bf16.msra.mxu0 %v1178
        %1566 = vmatpush.bf16.msra.mxu0 %v1170
        %1567 = vmatpush.bf16.msra.mxu0 %v1162
        %1568 = vmatpush.bf16.msra.mxu0 %v1154
        %1569 = vmatpush.bf16.msra.mxu0 %v1146
        %1570 = vmatpush.bf16.msra.mxu0 %v1138
        %1571 = vmatpush.bf16.msra.mxu0 %v1130
        %1572 = vmatmul.bf16.gmra.mxu0 %v229
        %v1573 = vpop.f32.mrf.mxu0
        %v1574 = vadd.f32 %v1561, %v1573
        %v1575 = vpop.f32.mrf.mxu0
        %1576 = vdwg.mxu0
        %1577 = vmatpush.bf16.msra.mxu0 %v1059
        %1578 = vmatpush.bf16.msra.mxu0 %v1051
        %1579 = vmatpush.bf16.msra.mxu0 %v1043
        %1580 = vmatpush.bf16.msra.mxu0 %v1035
        %1581 = vmatpush.bf16.msra.mxu0 %v1027
        %1582 = vmatpush.bf16.msra.mxu0 %v1019
        %1583 = vmatpush.bf16.msra.mxu0 %v1011
        %1584 = vmatpush.bf16.msra.mxu0 %v1003
        %1585 = vmatmul.bf16.gmra.mxu0 %v223
        %v1586 = vpop.f32.mrf.mxu0
        %v1587 = vadd.f32 0.0, %v1586
        %v1588 = vpop.f32.mrf.mxu0
        %1589 = vdwg.mxu0
        %1590 = vmatpush.bf16.msra.mxu0 %v1123
        %1591 = vmatpush.bf16.msra.mxu0 %v1115
        %1592 = vmatpush.bf16.msra.mxu0 %v1107
        %1593 = vmatpush.bf16.msra.mxu0 %v1099
        %1594 = vmatpush.bf16.msra.mxu0 %v1091
        %1595 = vmatpush.bf16.msra.mxu0 %v1083
        %1596 = vmatpush.bf16.msra.mxu0 %v1075
        %1597 = vmatpush.bf16.msra.mxu0 %v1067
        %1598 = vmatmul.bf16.gmra.mxu0 %v226
        %v1599 = vpop.f32.mrf.mxu0
        %v1600 = vadd.f32 %v1587, %v1599
        %v1601 = vpop.f32.mrf.mxu0
        %1602 = vdwg.mxu0
        %1603 = vmatpush.bf16.msra.mxu0 %v1187
        %1604 = vmatpush.bf16.msra.mxu0 %v1179
        %1605 = vmatpush.bf16.msra.mxu0 %v1171
        %1606 = vmatpush.bf16.msra.mxu0 %v1163
        %1607 = vmatpush.bf16.msra.mxu0 %v1155
        %1608 = vmatpush.bf16.msra.mxu0 %v1147
        %1609 = vmatpush.bf16.msra.mxu0 %v1139
        %1610 = vmatpush.bf16.msra.mxu0 %v1131
        %1611 = vmatmul.bf16.gmra.mxu0 %v229
        %v1612 = vpop.f32.mrf.mxu0
        %v1613 = vadd.f32 %v1600, %v1612
        %v1614 = vpop.f32.mrf.mxu0
        %1615 = vdwg.mxu0
        %1616 = vmatpush.bf16.msra.mxu0 %v1060
        %1617 = vmatpush.bf16.msra.mxu0 %v1052
        %1618 = vmatpush.bf16.msra.mxu0 %v1044
        %1619 = vmatpush.bf16.msra.mxu0 %v1036
        %1620 = vmatpush.bf16.msra.mxu0 %v1028
        %1621 = vmatpush.bf16.msra.mxu0 %v1020
        %1622 = vmatpush.bf16.msra.mxu0 %v1012
        %1623 = vmatpush.bf16.msra.mxu0 %v1004
        %1624 = vmatmul.bf16.gmra.mxu0 %v223
        %v1625 = vpop.f32.mrf.mxu0
        %v1626 = vadd.f32 0.0, %v1625
        %v1627 = vpop.f32.mrf.mxu0
        %1628 = vdwg.mxu0
        %1629 = vmatpush.bf16.msra.mxu0 %v1124
        %1630 = vmatpush.bf16.msra.mxu0 %v1116
        %1631 = vmatpush.bf16.msra.mxu0 %v1108
        %1632 = vmatpush.bf16.msra.mxu0 %v1100
        %1633 = vmatpush.bf16.msra.mxu0 %v1092
        %1634 = vmatpush.bf16.msra.mxu0 %v1084
        %1635 = vmatpush.bf16.msra.mxu0 %v1076
        %1636 = vmatpush.bf16.msra.mxu0 %v1068
        %1637 = vmatmul.bf16.gmra.mxu0 %v226
        %v1638 = vpop.f32.mrf.mxu0
        %v1639 = vadd.f32 %v1626, %v1638
        %v1640 = vpop.f32.mrf.mxu0
        %1641 = vdwg.mxu0
        %1642 = vmatpush.bf16.msra.mxu0 %v1188
        %1643 = vmatpush.bf16.msra.mxu0 %v1180
        %1644 = vmatpush.bf16.msra.mxu0 %v1172
        %1645 = vmatpush.bf16.msra.mxu0 %v1164
        %1646 = vmatpush.bf16.msra.mxu0 %v1156
        %1647 = vmatpush.bf16.msra.mxu0 %v1148
        %1648 = vmatpush.bf16.msra.mxu0 %v1140
        %1649 = vmatpush.bf16.msra.mxu0 %v1132
        %1650 = vmatmul.bf16.gmra.mxu0 %v229
        %v1651 = vpop.f32.mrf.mxu0
        %v1652 = vadd.f32 %v1639, %v1651
        %v1653 = vpop.f32.mrf.mxu0
        %1654 = vdwg.mxu0
        %1655 = vmatpush.bf16.msra.mxu0 %v1061
        %1656 = vmatpush.bf16.msra.mxu0 %v1053
        %1657 = vmatpush.bf16.msra.mxu0 %v1045
        %1658 = vmatpush.bf16.msra.mxu0 %v1037
        %1659 = vmatpush.bf16.msra.mxu0 %v1029
        %1660 = vmatpush.bf16.msra.mxu0 %v1021
        %1661 = vmatpush.bf16.msra.mxu0 %v1013
        %1662 = vmatpush.bf16.msra.mxu0 %v1005
        %1663 = vmatmul.bf16.gmra.mxu0 %v223
        %v1664 = vpop.f32.mrf.mxu0
        %v1665 = vadd.f32 0.0, %v1664
        %v1666 = vpop.f32.mrf.mxu0
        %1667 = vdwg.mxu0
        %1668 = vmatpush.bf16.msra.mxu0 %v1125
        %1669 = vmatpush.bf16.msra.mxu0 %v1117
        %1670 = vmatpush.bf16.msra.mxu0 %v1109
        %1671 = vmatpush.bf16.msra.mxu0 %v1101
        %1672 = vmatpush.bf16.msra.mxu0 %v1093
        %1673 = vmatpush.bf16.msra.mxu0 %v1085
        %1674 = vmatpush.bf16.msra.mxu0 %v1077
        %1675 = vmatpush.bf16.msra.mxu0 %v1069
        %1676 = vmatmul.bf16.gmra.mxu0 %v226
        %v1677 = vpop.f32.mrf.mxu0
        %v1678 = vadd.f32 %v1665, %v1677
        %v1679 = vpop.f32.mrf.mxu0
        %1680 = vdwg.mxu0
        %1681 = vmatpush.bf16.msra.mxu0 %v1189
        %1682 = vmatpush.bf16.msra.mxu0 %v1181
        %1683 = vmatpush.bf16.msra.mxu0 %v1173
        %1684 = vmatpush.bf16.msra.mxu0 %v1165
        %1685 = vmatpush.bf16.msra.mxu0 %v1157
        %1686 = vmatpush.bf16.msra.mxu0 %v1149
        %1687 = vmatpush.bf16.msra.mxu0 %v1141
        %1688 = vmatpush.bf16.msra.mxu0 %v1133
        %1689 = vmatmul.bf16.gmra.mxu0 %v229
        %v1690 = vpop.f32.mrf.mxu0
        %v1691 = vadd.f32 %v1678, %v1690
        %v1692 = vpop.f32.mrf.mxu0
        %1693 = vdwg.mxu0
        %v1694 = vld [vmem:[#allocation7] sm:$0xff]
        %v1696 = vperm.slane %v1694, 0
        %v1697 = vperm.slane %v1694, 1
        %v1698 = vperm.slane %v1694, 2
        %v1699 = vperm.slane %v1694, 3
        %v1700 = vperm.slane %v1694, 4
        %v1701 = vperm.slane %v1694, 5
        %v1702 = vperm.slane %v1694, 6
        %v1703 = vperm.slane %v1694, 7
        %v1712 = vsub.f32 %v1418, %v1696
        %v1713 = vsub.f32 %v1457, %v1697
        %v1714 = vsub.f32 %v1496, %v1698
        %v1715 = vsub.f32 %v1535, %v1699
        %v1716 = vsub.f32 %v1574, %v1700
        %v1717 = vsub.f32 %v1613, %v1701
        %v1718 = vsub.f32 %v1652, %v1702
        %v1719 = vsub.f32 %v1691, %v1703
        %v1720 = vmul.f32 %v1712, %v1712
        %v1721 = vmul.f32 %v1713, %v1713
        %v1722 = vmul.f32 %v1714, %v1714
        %v1723 = vmul.f32 %v1715, %v1715
        %v1724 = vmul.f32 %v1716, %v1716
        %v1725 = vmul.f32 %v1717, %v1717
        %v1726 = vmul.f32 %v1718, %v1718
        %v1727 = vmul.f32 %v1719, %v1719
        %v1728 = vsub.f32 0.0, %v1720
        %v1729 = vsub.f32 0.0, %v1721
        %v1730 = vsub.f32 0.0, %v1722
        %v1731 = vsub.f32 0.0, %v1723
        %v1732 = vsub.f32 0.0, %v1724
        %v1733 = vsub.f32 0.0, %v1725
        %v1734 = vsub.f32 0.0, %v1726
        %v1735 = vsub.f32 0.0, %v1727
        %v1736 = vmul.f32 %v1728, 1.442695
        %v1737 = vpow.pop %v1736
        %v1738 = vmul.f32 %v1729, 1.442695
        %v1739 = vpow.pop %v1738
        %v1740 = vmul.f32 %v1730, 1.442695
        %v1741 = vpow.pop %v1740
        %v1742 = vmul.f32 %v1731, 1.442695
        %v1743 = vpow.pop %v1742
        %v1744 = vmul.f32 %v1732, 1.442695
        %v1745 = vpow.pop %v1744
        %v1746 = vmul.f32 %v1733, 1.442695
        %v1747 = vpow.pop %v1746
        %v1748 = vmul.f32 %v1734, 1.442695
        %v1749 = vpow.pop %v1748
        %v1750 = vmul.f32 %v1735, 1.442695
        %v1751 = vpow.pop %v1750
        %1752 = vst [vmem:[%s218] sm:$0xff] %v1737
        %1753 = vst [vmem:[%s218 + $0x8] sm:$0xff] %v1739
        %1754 = vst [vmem:[%s218 + $0x10] sm:$0xff] %v1741
        %1755 = vst [vmem:[%s218 + $0x18] sm:$0xff] %v1743
        %1756 = vst [vmem:[%s218 + $0x20] sm:$0xff] %v1745
        %1757 = vst [vmem:[%s218 + $0x28] sm:$0xff] %v1747
        %1758 = vst [vmem:[%s218 + $0x30] sm:$0xff] %v1749
        %1759 = vst [vmem:[%s218 + $0x38] sm:$0xff] %v1751
        %s1760 = sand.u32 %s97, 1
        %s1761 = scalar_lea.sflag [#allocation4], %s1760
        %s1762 = sand.u32 %s97, 1
        %s1763 = smul.addr %s1762, 64
        %s1764 = scalar_lea.vmem [#allocation8], %s1763
        // Predicated region
        $region45: #{tpu_custom_call.1} parent=31 // pred_check
          %p1765 = pneg %p107
        $region46: #{tpu_custom_call.1} parent=31 // pred_check_branch
          %1767 = sbr.rel (%p1765) target = $region48
        $region47: #{tpu_custom_call.1} parent=31 // pred_region
          %1769 = vsyncadd %s1761, 0
          %s1770 = smul.addr %s21, 8
          %s1771 = smul.addr %s1770, 8
          %s1772 = scalar_lea.hbm %s3, %s1771
          %s1774 = sshll.u32 %s1764, 4
          %s1775 = int_to_ptr.vmem [resolvable:$true] %s1774
          %s1776 = sshll.u32 %s1772, 4
          %s1777 = int_to_ptr.hbm [resolvable:$true] %s1776
          %1779 = dma.vmem_to_hbm [thread:$0]  %s1775, 1024, %s1777, %s1761
        $region48: #{tpu_custom_call.1} parent=31 // pred_fallthru
          _
      $region32: #{tpu_custom_call.1} parent=5 // pred_fallthru
        _
      %p1780 = scmp.le.s32.totalorder 2, %s16
      // Predicated region
      $region49: #{tpu_custom_call.1} parent=5 // pred_check
        %p1781 = pneg %p1780
      $region50: #{tpu_custom_call.1} parent=5 // pred_check_branch
        %1783 = sbr.rel (%p1781) target = $region52
      $region51: #{tpu_custom_call.1} parent=5 // pred_region
        %s1784 = ssub.s32 %s16, 2
        // Predicated region
        $region53: #{tpu_custom_call.1} parent=51 // pred_check
          %p1785 = pneg %p113
        $region54: #{tpu_custom_call.1} parent=51 // pred_check_branch
          %1787 = sbr.rel (%p1785) target = $region56
        $region55: #{tpu_custom_call.1} parent=51 // pred_region
          %s1788 = sand.u32 %s98, 1
          %s1789 = scalar_lea.sflag [#allocation4], %s1788
          %s1790 = sand.u32 %s98, 1
          %s1791 = smul.addr %s1790, 64
          %s1792 = scalar_lea.vmem [#allocation8], %s1791
          %1794 = dma.done %s1789, 1024
        $region56: #{tpu_custom_call.1} parent=51 // pred_fallthru
          _
      $region52: #{tpu_custom_call.1} parent=5 // pred_fallthru
        _
    $region6: #{tpu_custom_call.1} parent=1 // loop_footer
      %s20 = sadd.s32 1, %s16
    $region7: #{tpu_custom_call.1} parent=1 // loop_footer_branch
      %15 = sbr.rel target = $region3
    $region8: #{tpu_custom_call.1} parent=1 // loop_exit
      _
    %1795 = vsyncpa [#allocation3], 1
    %s1796 = scalar_lea.sflag [#allocation3], 1
    %1797 = vsyncpa %s1796, 1
    %1798 = vsyncpa [#allocation6], 1
    %1799 = vsyncpa [#allocation4], 1
    %s1800 = scalar_lea.sflag [#allocation4], 1
    %1801 = vsyncpa %s1800, 1

</llo_original>
